<compile_context>
chip_gen: v6e
topology: v6e:2x2x1
jax: 0.10.0
libtpu: 0.0.40
codegen_flags: <defaults>
</compile_context>

<pallas_src>
import functools

import jax
import jax.numpy as jnp
from jax.experimental import pallas as pl
from jax.experimental.pallas import tpu as pltpu

HIDDEN = 500                   # fixed hidden width of DeepSVDDNetwork_mlp.ff1
HIDDEN_PAD = 512               # lane-dense padded hidden width (multiple of 128)
LANE = 128
SUBLANE = 8
TILE_B_MAX = 1024              # max batch rows per grid step (review: raise from 512)
VMEM_SOFT_BUDGET = 24 << 20    # conservative vs. the 32 MiB scoped default (v7x-safe)
LEAKY_SLOPE = 0.01             # F.leaky_relu default negative slope
COMPUTE_DTYPE = jnp.bfloat16   # MXU operand dtype (f32 accumulation)


def _round_up(n, m):
    return ((n + m - 1) // m) * m


def _cdiv(a, b):
    return (a + b - 1) // b


# ------------------------------------------------------------------ kernels --

def _encoder_kernel(x_ref, w1_ref, w23_ref, z_ref):
    """z = leaky_relu(x @ W1pad) @ W23pad   (bf16 operands, f32 accumulation).

    Output tile is lane-dense: rep axis padded to a multiple of 128."""
    x = x_ref[...].astype(COMPUTE_DTYPE)
    h = jnp.dot(x, w1_ref[...], preferred_element_type=jnp.float32)
    h = jnp.where(h >= 0, h, LEAKY_SLOPE * h)          # F.leaky_relu (f32 VPU: v5e-safe)
    z_ref[...] = jnp.dot(h.astype(COMPUTE_DTYPE), w23_ref[...],
                         preferred_element_type=jnp.float32)


def _projector_kernel(z_ref, m_ref, out_ref):
    """out = z @ Mpad, where Mpad = pad(V*diag(S)) was precomputed in the wrapper.

    bf16 operands, f32 accumulation, lane-dense (tile_b, rep_pad) store.
    NOTE: for rep_dim <= 128 and tiny batches this matmul is also fine in plain
    XLA; the Pallas path is kept so the whole batch pipeline stays on one tiling."""
    out_ref[...] = jnp.dot(z_ref[...].astype(COMPUTE_DTYPE), m_ref[...],
                           preferred_element_type=jnp.float32)


# ------------------------------------------------------------- param prep ----

def prepare_params(params):
    """One-time conversion of PyTorch-layout (out,in) weights into kernel-ready
    operands (fold, pad, transpose, cast). Done OUTSIDE the per-call forward."""
    w1, w2, w3 = params["w1"], params["w2"], params["w3"]
    input_dim = w1.shape[1]
    rep_dim = w2.shape[0]
    rep_pad = _round_up(rep_dim, LANE)
    # ff1: (input_dim, 500) -> zero-pad hidden lanes to 512
    w1k = jnp.zeros((input_dim, HIDDEN_PAD), jnp.float32).at[:, :HIDDEN].set(w1.T)
    # fold ff2/ff3: z = h @ (W3 @ W2)^T ; pad rows 500->512 and cols rep_dim->128k
    w23 = (w3 @ w2).T                                   # (500, rep_dim)
    w23k = jnp.zeros((HIDDEN_PAD, rep_pad), jnp.float32).at[:HIDDEN, :rep_dim].set(w23)
    return {
        "w1k": w1k.astype(COMPUTE_DTYPE),
        "w23k": w23k.astype(COMPUTE_DTYPE),
    }


# ------------------------------------------------------------- batch tiling --

def _pick_batch_tiling(B, input_dim, rep_pad):
    """Balanced batch tiles: minimal tail padding, >=2 grid steps when possible
    (v7x megacore), and a tile cap re-derived from a conservative VMEM budget."""
    b_pad0 = _round_up(B, SUBLANE)
    # double-buffered x/z tiles + (assume double-buffered) resident bf16 weights
    weight_bytes = 2 * (input_dim * HIDDEN_PAD * 2 + HIDDEN_PAD * rep_pad * 2)
    row_bytes = 2 * (input_dim * 4) + 2 * (rep_pad * 4)
    vmem_cap = max(SUBLANE,
                   ((VMEM_SOFT_BUDGET - weight_bytes) // row_bytes) // SUBLANE * SUBLANE)
    tile_cap = min(TILE_B_MAX, vmem_cap)
    n_steps = _cdiv(b_pad0, tile_cap)
    if b_pad0 >= 2 * SUBLANE:
        n_steps = max(n_steps, 2)          # keep both v7x TensorCores busy
    tile_b = _round_up(_cdiv(b_pad0, n_steps), SUBLANE)
    b_pad = tile_b * _cdiv(b_pad0, tile_b)
    return b_pad, tile_b


# ----------------------------------------------------------------- forward ---

def deep_svdd_mlp_forward(x, kparams, *, rep_dim, use_gram_eigh=True):
    """x: (batch, input_dim) float32. Requires batch >= rep_dim (implicit in the
    PyTorch module's weightConstraint). `rep_dim` must be a static Python int."""
    B, input_dim = x.shape
    w1k, w23k = kparams["w1k"], kparams["w23k"]
    assert input_dim == w1k.shape[0]
    rep_pad = w23k.shape[1]
    assert rep_dim <= rep_pad
    assert B >= rep_dim, "weightConstraint semantics require batch >= rep_dim"

    b_pad, tile_b = _pick_batch_tiling(B, input_dim, rep_pad)
    x_pad = x if b_pad == B else jnp.zeros((b_pad, input_dim), x.dtype).at[:B].set(x)
    grid = (b_pad // tile_b,)

    enc_cost = pl.CostEstimate(
        flops=2 * b_pad * input_dim * HIDDEN_PAD
        + 2 * b_pad * HIDDEN_PAD * rep_pad + b_pad * HIDDEN_PAD,
        transcendentals=0,
        bytes_accessed=4 * b_pad * input_dim + 2 * input_dim * HIDDEN_PAD
        + 2 * HIDDEN_PAD * rep_pad + 4 * b_pad * rep_pad,
    )
    z_pad = pl.pallas_call(
        _encoder_kernel,
        out_shape=jax.ShapeDtypeStruct((b_pad, rep_pad), jnp.float32),
        grid_spec=pltpu.PrefetchScalarGridSpec(
            num_scalar_prefetch=0,
            grid=grid,
            in_specs=[
                pl.BlockSpec((tile_b, input_dim), lambda i: (i, 0)),
                pl.BlockSpec((input_dim, HIDDEN_PAD), lambda i: (0, 0)),
                pl.BlockSpec((HIDDEN_PAD, rep_pad), lambda i: (0, 0)),
            ],
            out_specs=pl.BlockSpec((tile_b, rep_pad), lambda i: (i, 0)),
        ),
        compiler_params=pltpu.CompilerParams(dimension_semantics=("parallel",)),
        cost_estimate=enc_cost,
    )(x_pad, w1k, w23k)

    # TODO(synk): the matrix factorization (torch.svd) has no Pallas equivalent;
    # it is done with plain JAX (XLA) between the two kernels.
    # torch.svd(z): z = U diag(S) V^T, constrained projector weight = (V diag(S))^T,
    # so projector output = z @ V @ diag(S).  Only V and S are consumed, so the
    # default path uses the rep x rep Gram matrix: z^T z = V diag(S)^2 V^T (far
    # cheaper than the (B x rep) SVD; V's per-column sign is ambiguous either way).
    z = z_pad[:, :rep_dim]                     # drop zero lane padding
    if use_gram_eigh:
        g = jnp.dot(z.T, z, preferred_element_type=jnp.float32)  # padded rows are 0
        evals, evecs = jnp.linalg.eigh(g)                        # ascending order
        s = jnp.sqrt(jnp.maximum(evals[::-1], 0.0))              # singular values, desc
        v = evecs[:, ::-1]
    else:
        _, s, vh = jnp.linalg.svd(z[:B], full_matrices=False)
        v = vh.T                                                  # (rep_dim, rep_dim)

    # Hoisted, batch-independent projector weight: M = V diag(S), padded lane-dense
    # and pre-cast to bf16 once (review: no per-step rescale / extra input DMA).
    m = (v * s.reshape(1, rep_dim)).astype(COMPUTE_DTYPE)
    m_pad = jnp.zeros((rep_pad, rep_pad), COMPUTE_DTYPE).at[:rep_dim, :rep_dim].set(m)

    proj_cost = pl.CostEstimate(
        flops=2 * b_pad * rep_pad * rep_pad,
        transcendentals=0,
        bytes_accessed=8 * b_pad * rep_pad + 2 * rep_pad * rep_pad,
    )
    out_pad = pl.pallas_call(
        _projector_kernel,
        out_shape=jax.ShapeDtypeStruct((b_pad, rep_pad), jnp.float32),
        grid_spec=pltpu.PrefetchScalarGridSpec(
            num_scalar_prefetch=0,
            grid=grid,
            in_specs=[
                pl.BlockSpec((tile_b, rep_pad), lambda i: (i, 0)),
                pl.BlockSpec((rep_pad, rep_pad), lambda i: (0, 0)),
            ],
            out_specs=pl.BlockSpec((tile_b, rep_pad), lambda i: (i, 0)),
        ),
        compiler_params=pltpu.CompilerParams(dimension_semantics=("parallel",)),
        cost_estimate=proj_cost,
    )(z_pad, m_pad)
    return out_pad[:B, :rep_dim]


# -------------------------------------------------------------------- init ---

def init_params(key, input_dim, rep_dim):
    """PyTorch-Linear-style init: U(-1/sqrt(fan_in), 1/sqrt(fan_in)). The
    projector's own initial weight is irrelevant (overwritten by the constraint)."""
    ks = jax.random.split(key, 3)

    def lin(k, out_f, in_f):
        bound = 1.0 / (in_f ** 0.5)
        return jax.random.uniform(k, (out_f, in_f), jnp.float32, -bound, bound)

    return {
        "w1": lin(ks[0], HIDDEN, input_dim),   # ff1: input_dim -> 500
        "w2": lin(ks[1], rep_dim, HIDDEN),     # ff2: 500 -> rep_dim
        "w3": lin(ks[2], rep_dim, rep_dim),    # ff3: rep_dim -> rep_dim
    }


if __name__ == "__main__":
    key = jax.random.PRNGKey(0)
    kx, kp = jax.random.split(key)

    input_dim, rep_dim, batch = 16, 32, 64     # batch >= rep_dim is required
    params = init_params(kp, input_dim, rep_dim)
    kparams = prepare_params(params)           # one-time weight fold/pad/cast
    x = jax.random.normal(kx, (batch, input_dim), jnp.float32)

    fwd = jax.jit(functools.partial(deep_svdd_mlp_forward, rep_dim=rep_dim))
    out = fwd(x, kparams)
    jax.block_until_ready(out)
    assert out.shape == (batch, rep_dim) and out.dtype == jnp.float32
    assert bool(jnp.all(jnp.isfinite(out)))
    print("KERNEL_OK")
</pallas_src>

<mosaic_0001>
module attributes {stable_mosaic.version = 11 : i64} {
  func.func @_encoder_kernel(%arg0: i32, %arg1: memref<32x16xf32, #tpu.memory_space<vmem>>, %arg2: memref<16x512xbf16, #tpu.memory_space<vmem>>, %arg3: memref<512x128xbf16, #tpu.memory_space<vmem>>, %arg4: memref<32x128xf32, #tpu.memory_space<vmem>>) attributes {dimension_semantics = [#tpu.dimension_semantics<parallel>], iteration_bounds = array<i64: 2>, scalar_prefetch = 0 : i64, scratch_operands = 0 : i64, tpu.core_type = #tpu.core_type<tc>, window_params = [{transform_indices = @transform_0, window_bounds = array<i64: 32, 16>}, {pipeline_mode = #tpu.pipeline_mode<synchronous>, transform_indices = @transform_1, window_bounds = array<i64: 16, 512>}, {pipeline_mode = #tpu.pipeline_mode<synchronous>, transform_indices = @transform_2, window_bounds = array<i64: 512, 128>}, {transform_indices = @transform_3, window_bounds = array<i64: 32, 128>}]} {
    %c0 = arith.constant 0 : index
    %c0_0 = arith.constant 0 : index
    %0 = vector.load %arg1[%c0, %c0_0] : memref<32x16xf32, #tpu.memory_space<vmem>>, vector<32x16xf32>
    %1 = arith.truncf %0 : vector<32x16xf32> to vector<32x16xbf16>
    %c0_1 = arith.constant 0 : index
    %c0_2 = arith.constant 0 : index
    %2 = vector.load %arg2[%c0_1, %c0_2] : memref<16x512xbf16, #tpu.memory_space<vmem>>, vector<16x512xbf16>
    %cst = arith.constant dense<0.000000e+00> : vector<32x512xf32>
    %3 = tpu.matmul %1, %2, %cst {dimension_numbers = #tpu.dot_dimension_numbers<[1], [0], [0], [1], [0, 0, 1, 1], [], []>} : vector<32x16xbf16>, vector<16x512xbf16>, vector<32x512xf32> -> vector<32x512xf32>
    %cst_3 = arith.constant 0.000000e+00 : f32
    %4 = vector.broadcast %cst_3 : f32 to vector<32x512xf32>
    %5 = arith.cmpf oge, %3, %4 : vector<32x512xf32>
    %cst_4 = arith.constant 0.00999999977 : f32
    %6 = vector.broadcast %cst_4 : f32 to vector<32x512xf32>
    %7 = arith.mulf %6, %3 : vector<32x512xf32>
    %8 = arith.select %5, %3, %7 : vector<32x512xi1>, vector<32x512xf32>
    %9 = arith.truncf %8 : vector<32x512xf32> to vector<32x512xbf16>
    %c0_5 = arith.constant 0 : index
    %c0_6 = arith.constant 0 : index
    %10 = vector.load %arg3[%c0_5, %c0_6] : memref<512x128xbf16, #tpu.memory_space<vmem>>, vector<512x128xbf16>
    %cst_7 = arith.constant dense<0.000000e+00> : vector<32x128xf32>
    %11 = tpu.matmul %9, %10, %cst_7 {dimension_numbers = #tpu.dot_dimension_numbers<[1], [0], [0], [1], [0, 0, 1, 1], [], []>} : vector<32x512xbf16>, vector<512x128xbf16>, vector<32x128xf32> -> vector<32x128xf32>
    %c0_8 = arith.constant 0 : index
    %c0_9 = arith.constant 0 : index
    %12 = vector.load %arg4[%c0_8, %c0_9] : memref<32x128xf32, #tpu.memory_space<vmem>>, vector<32x128xf32>
    tpu.vector_store %arg4[%c0_8, %c0_9], %11 {strides = array<i32>} : memref<32x128xf32, #tpu.memory_space<vmem>>, vector<32x128xf32>,
    return
  }
  func.func @transform_0(%arg0: i32) -> (i32, i32) {
    %c0_i32 = arith.constant 0 : i32
    %c0_i32_0 = arith.constant 0 : i32
    return %arg0, %c0_i32 : i32, i32
  }
  func.func @transform_1(%arg0: i32) -> (i32, i32) {
    %c0_i32 = arith.constant 0 : i32
    %c0_i32_0 = arith.constant 0 : i32
    %c0_i32_1 = arith.constant 0 : i32
    return %c0_i32, %c0_i32_0 : i32, i32
  }
  func.func @transform_2(%arg0: i32) -> (i32, i32) {
    %c0_i32 = arith.constant 0 : i32
    %c0_i32_0 = arith.constant 0 : i32
    %c0_i32_1 = arith.constant 0 : i32
    return %c0_i32, %c0_i32_0 : i32, i32
  }
  func.func @transform_3(%arg0: i32) -> (i32, i32) {
    %c0_i32 = arith.constant 0 : i32
    %c0_i32_0 = arith.constant 0 : i32
    return %arg0, %c0_i32 : i32, i32
  }
}

module attributes {stable_mosaic.version = 11 : i64} {
  func.func @_projector_kernel(%arg0: i32, %arg1: memref<32x128xf32, #tpu.memory_space<vmem>>, %arg2: memref<128x128xbf16, #tpu.memory_space<vmem>>, %arg3: memref<32x128xf32, #tpu.memory_space<vmem>>) attributes {dimension_semantics = [#tpu.dimension_semantics<parallel>], iteration_bounds = array<i64: 2>, scalar_prefetch = 0 : i64, scratch_operands = 0 : i64, tpu.core_type = #tpu.core_type<tc>, window_params = [{transform_indices = @transform_0, window_bounds = array<i64: 32, 128>}, {pipeline_mode = #tpu.pipeline_mode<synchronous>, transform_indices = @transform_1, window_bounds = array<i64: 128, 128>}, {transform_indices = @transform_2, window_bounds = array<i64: 32, 128>}]} {
    %c0 = arith.constant 0 : index
    %c0_0 = arith.constant 0 : index
    %0 = vector.load %arg1[%c0, %c0_0] : memref<32x128xf32, #tpu.memory_space<vmem>>, vector<32x128xf32>
    %1 = arith.truncf %0 : vector<32x128xf32> to vector<32x128xbf16>
    %c0_1 = arith.constant 0 : index
    %c0_2 = arith.constant 0 : index
    %2 = vector.load %arg2[%c0_1, %c0_2] : memref<128x128xbf16, #tpu.memory_space<vmem>>, vector<128x128xbf16>
    %cst = arith.constant dense<0.000000e+00> : vector<32x128xf32>
    %3 = tpu.matmul %1, %2, %cst {dimension_numbers = #tpu.dot_dimension_numbers<[1], [0], [0], [1], [0, 0, 1, 1], [], []>} : vector<32x128xbf16>, vector<128x128xbf16>, vector<32x128xf32> -> vector<32x128xf32>
    %c0_3 = arith.constant 0 : index
    %c0_4 = arith.constant 0 : index
    %4 = vector.load %arg3[%c0_3, %c0_4] : memref<32x128xf32, #tpu.memory_space<vmem>>, vector<32x128xf32>
    tpu.vector_store %arg3[%c0_3, %c0_4], %3 {strides = array<i32>} : memref<32x128xf32, #tpu.memory_space<vmem>>, vector<32x128xf32>,
    return
  }
  func.func @transform_0(%arg0: i32) -> (i32, i32) {
    %c0_i32 = arith.constant 0 : i32
    %c0_i32_0 = arith.constant 0 : i32
    return %arg0, %c0_i32 : i32, i32
  }
  func.func @transform_1(%arg0: i32) -> (i32, i32) {
    %c0_i32 = arith.constant 0 : i32
    %c0_i32_0 = arith.constant 0 : i32
    %c0_i32_1 = arith.constant 0 : i32
    return %c0_i32, %c0_i32_0 : i32, i32
  }
  func.func @transform_2(%arg0: i32) -> (i32, i32) {
    %c0_i32 = arith.constant 0 : i32
    %c0_i32_0 = arith.constant 0 : i32
    return %arg0, %c0_i32 : i32, i32
  }
}

</mosaic_0001>

<llo_original>
// kernel: custom-call.2
$region0: #{custom-call.2}
  %s0 = inlined_call_operand.vmem [shape: f32[16,16], index: 0, kind: input, shape index: {}]
  %s1 = inlined_call_operand.vmem [shape: f32[16,16], index: 1, kind: input, shape index: {}]
  %s2 = inlined_call_operand.vmem [shape: f32[16,16], index: 2, kind: input, shape index: {}]
  %s3 = inlined_call_operand.vmem [shape: f32[16,16], index: 3, kind: input, shape index: {}]
  %s4 = inlined_call_operand.vmem [shape: f32[16], index: 4, kind: output, shape index: {0}]
  %s5 = inlined_call_operand.vmem [shape: f32[16], index: 5, kind: output, shape index: {1}]
  %s6 = inlined_call_operand.vmem [shape: f32[16,16], index: 6, kind: output, shape index: {2}]
  %s7 = inlined_call_operand.vmem [shape: f32[16,16], index: 7, kind: output, shape index: {3}]
  %s8 = inlined_call_operand.vmem [shape: f32[16,16], index: 8, kind: output, shape index: {4}]
  %s9 = inlined_call_operand.vmem [shape: f32[16,16], index: 9, kind: output, shape index: {5}]
  %10 = xla_tuple %s4, %s5, %s6, %s7, %s8, %s9
  $region1: #{custom-call.2} parent=0
    #allocation0 [shape = 'u8[8192]{0}', space=vmem, size = 0x2000, scoped, tag = 'operand span for operand 0']
    #allocation1 [shape = 'u8[8192]{0}', space=vmem, size = 0x2000, scoped, tag = 'operand span for operand 1']
    #allocation2 [shape = 'u8[8192]{0}', space=vmem, size = 0x2000, scoped, tag = 'operand span for operand 2']
    #allocation3 [shape = 'u8[8192]{0}', space=vmem, size = 0x2000, scoped, tag = 'operand span for operand 3']
    #allocation4 [shape = 'u8[4096]{0}', space=vmem, size = 0x1000, scoped, tag = 'operand span for operand 4']
    #allocation5 [shape = 'u8[512]{0}', space=vmem, size = 0x400, scoped, tag = 'packed  for operand 4']
    #allocation6 [shape = 'u8[4096]{0}', space=vmem, size = 0x1000, scoped, tag = 'operand span for operand 5']
    #allocation7 [shape = 'u8[512]{0}', space=vmem, size = 0x400, scoped, tag = 'packed  for operand 5']
    #allocation8 [shape = 'u8[8192]{0}', space=vmem, size = 0x2000, scoped, tag = 'operand span for operand 6']
    #allocation9 [shape = 'u8[8192]{0}', space=vmem, size = 0x2000, scoped, tag = 'operand span for operand 7']
    #allocation10 [shape = 'u8[8192]{0}', space=vmem, size = 0x2000, scoped, tag = 'operand span for operand 8']
    #allocation11 [shape = 'u8[8192]{0}', space=vmem, size = 0x2000, scoped, tag = 'operand span for operand 9']
    #allocation12 [shape = 'f32[16,16]{1,0}', space=vmem, size = 0x2000, scoped, tag = 'a top-left matrix']
    #allocation13 [shape = 'f32[16,16]{1,0}', space=vmem, size = 0x2000, scoped, tag = 'a top-right matrix']
    #allocation14 [shape = 'f32[16,16]{1,0}', space=vmem, size = 0x2000, scoped, tag = 'a bottom-left matrix']
    #allocation15 [shape = 'f32[16,16]{1,0}', space=vmem, size = 0x2000, scoped, tag = 'a bottom-right matrix']
    %p12 = scmp.gt.s32.totalorder 16, 0
    // Predicated region
    $region2: #{custom-call.2} parent=1 // pred_check
      %p13 = pneg %p12
    $region3: #{custom-call.2} parent=1 // pred_check_branch
      %15 = sbr.rel (%p13) target = $region5
    $region4: #{custom-call.2} parent=1 // pred_region
      %s16 = sshra.s32 16, 3
      %p17 = scmp.gt.s32.totalorder %s16, 0
      // Predicated region
      $region6: #{custom-call.2} parent=4 // pred_check
        %p18 = pneg %p17
      $region7: #{custom-call.2} parent=4 // pred_check_branch
        %20 = sbr.rel (%p18) target = $region9
      $region8: #{custom-call.2} parent=4 // pred_region
        %s21 = ssub.s32 %s16, 1
        %s22 = smul.u32 %s21, 128
        %s23 = sshra.s32 %s22, 4
        %s24 = scalar_lea.vmem %s0, %s23
        %v25 = vld [vmem:[%s0] sm:$0xff]
        // While loop
        $region10: #{custom-call.2} parent=8 // loop_pre_header
          _
        $region11: #{custom-call.2} parent=8 // loop_header
          %s26 = sphi %s0, %s48
          %s27 = sphi [#allocation0], %s49
          %v28 = vphi %v25, %v50
          %s29 = ssub.s32 %s24, 64
          %p30 = scmp.gt.s32.totalorder %s26, %s29
        $region12: #{custom-call.2} parent=8 // loop_header_branch
          %32 = sbr.rel (%p30) target = $region16
        $region13: #{custom-call.2} parent=8 // loop_body
          %33 = vst [vmem:[%s27] sm:$0xff] %v28
          %v34 = vld [vmem:[%s26 + $0x8] sm:$0xff]
          %35 = vst [vmem:[%s27 + $0x8] sm:$0xff] %v34
          %v36 = vld [vmem:[%s26 + $0x10] sm:$0xff]
          %37 = vst [vmem:[%s27 + $0x10] sm:$0xff] %v36
          %v38 = vld [vmem:[%s26 + $0x18] sm:$0xff]
          %39 = vst [vmem:[%s27 + $0x18] sm:$0xff] %v38
          %v40 = vld [vmem:[%s26 + $0x20] sm:$0xff]
          %41 = vst [vmem:[%s27 + $0x20] sm:$0xff] %v40
          %v42 = vld [vmem:[%s26 + $0x28] sm:$0xff]
          %43 = vst [vmem:[%s27 + $0x28] sm:$0xff] %v42
          %v44 = vld [vmem:[%s26 + $0x30] sm:$0xff]
          %45 = vst [vmem:[%s27 + $0x30] sm:$0xff] %v44
          %v46 = vld [vmem:[%s26 + $0x38] sm:$0xff]
          %47 = vst [vmem:[%s27 + $0x38] sm:$0xff] %v46
        $region14: #{custom-call.2} parent=8 // loop_footer
          %s48 = scalar_lea.vmem %s26, 64
          %s49 = scalar_lea.vmem %s27, 64
          %v50 = vld [vmem:[%s26 + $0x40] sm:$0xff]
        $region15: #{custom-call.2} parent=8 // loop_footer_branch
          %51 = sbr.rel target = $region11
        $region16: #{custom-call.2} parent=8 // loop_exit
          _
        // While loop
        $region17: #{custom-call.2} parent=8 // loop_pre_header
          _
        $region18: #{custom-call.2} parent=8 // loop_header
          %s52 = sphi %s26, %s60
          %s53 = sphi %s27, %s61
          %v54 = vphi %v28, %v54
          %p55 = scmp.gt.s32.totalorder %s52, %s24
        $region19: #{custom-call.2} parent=8 // loop_header_branch
          %57 = sbr.rel (%p55) target = $region23
        $region20: #{custom-call.2} parent=8 // loop_body
          %v58 = vld [vmem:[%s52] sm:$0xff]
          %59 = vst [vmem:[%s53] sm:$0xff] %v58
        $region21: #{custom-call.2} parent=8 // loop_footer
          %s60 = scalar_lea.vmem %s52, 8
          %s61 = scalar_lea.vmem %s53, 8
        $region22: #{custom-call.2} parent=8 // loop_footer_branch
          %62 = sbr.rel target = $region18
        $region23: #{custom-call.2} parent=8 // loop_exit
          _
      $region9: #{custom-call.2} parent=4 // pred_fallthru
        _
      %s63 = sand.u32 16, 7
      %s64 = sshll.u32 1, %s63
      %s65 = ssub.s32 %s64, 1
      %s66 = smul.u32 %s16, 128
      %s67 = sshra.s32 %s66, 4
      %s68 = scalar_lea.vmem [#allocation0], %s67
      %s69 = smul.u32 %s16, 128
      %s70 = sshra.s32 %s69, 4
      %s71 = scalar_lea.vmem %s0, %s70
      %v72 = vld [vmem:[%s71] sm:%s65]
      %73 = vst [vmem:[%s68] sm:%s65] %v72
    $region5: #{custom-call.2} parent=1 // pred_fallthru
      _
    %p75 = scmp.gt.s32.totalorder 16, 0
    // Predicated region
    $region24: #{custom-call.2} parent=1 // pred_check
      %p76 = pneg %p75
    $region25: #{custom-call.2} parent=1 // pred_check_branch
      %78 = sbr.rel (%p76) target = $region27
    $region26: #{custom-call.2} parent=1 // pred_region
      %s79 = sshra.s32 16, 3
      %p80 = scmp.gt.s32.totalorder %s79, 0
      // Predicated region
      $region28: #{custom-call.2} parent=26 // pred_check
        %p81 = pneg %p80
      $region29: #{custom-call.2} parent=26 // pred_check_branch
        %83 = sbr.rel (%p81) target = $region31
      $region30: #{custom-call.2} parent=26 // pred_region
        %s84 = ssub.s32 %s79, 1
        %s85 = smul.u32 %s84, 128
        %s86 = sshra.s32 %s85, 4
        %s87 = scalar_lea.vmem %s1, %s86
        %v88 = vld [vmem:[%s1] sm:$0xff]
        // While loop
        $region32: #{custom-call.2} parent=30 // loop_pre_header
          _
        $region33: #{custom-call.2} parent=30 // loop_header
          %s89 = sphi %s1, %s111
          %s90 = sphi [#allocation1], %s112
          %v91 = vphi %v88, %v113
          %s92 = ssub.s32 %s87, 64
          %p93 = scmp.gt.s32.totalorder %s89, %s92
        $region34: #{custom-call.2} parent=30 // loop_header_branch
          %95 = sbr.rel (%p93) target = $region38
        $region35: #{custom-call.2} parent=30 // loop_body
          %96 = vst [vmem:[%s90] sm:$0xff] %v91
          %v97 = vld [vmem:[%s89 + $0x8] sm:$0xff]
          %98 = vst [vmem:[%s90 + $0x8] sm:$0xff] %v97
          %v99 = vld [vmem:[%s89 + $0x10] sm:$0xff]
          %100 = vst [vmem:[%s90 + $0x10] sm:$0xff] %v99
          %v101 = vld [vmem:[%s89 + $0x18] sm:$0xff]
          %102 = vst [vmem:[%s90 + $0x18] sm:$0xff] %v101
          %v103 = vld [vmem:[%s89 + $0x20] sm:$0xff]
          %104 = vst [vmem:[%s90 + $0x20] sm:$0xff] %v103
          %v105 = vld [vmem:[%s89 + $0x28] sm:$0xff]
          %106 = vst [vmem:[%s90 + $0x28] sm:$0xff] %v105
          %v107 = vld [vmem:[%s89 + $0x30] sm:$0xff]
          %108 = vst [vmem:[%s90 + $0x30] sm:$0xff] %v107
          %v109 = vld [vmem:[%s89 + $0x38] sm:$0xff]
          %110 = vst [vmem:[%s90 + $0x38] sm:$0xff] %v109
        $region36: #{custom-call.2} parent=30 // loop_footer
          %s111 = scalar_lea.vmem %s89, 64
          %s112 = scalar_lea.vmem %s90, 64
          %v113 = vld [vmem:[%s89 + $0x40] sm:$0xff]
        $region37: #{custom-call.2} parent=30 // loop_footer_branch
          %114 = sbr.rel target = $region33
        $region38: #{custom-call.2} parent=30 // loop_exit
          _
        // While loop
        $region39: #{custom-call.2} parent=30 // loop_pre_header
          _
        $region40: #{custom-call.2} parent=30 // loop_header
          %s115 = sphi %s89, %s123
          %s116 = sphi %s90, %s124
          %v117 = vphi %v91, %v117
          %p118 = scmp.gt.s32.totalorder %s115, %s87
        $region41: #{custom-call.2} parent=30 // loop_header_branch
          %120 = sbr.rel (%p118) target = $region45
        $region42: #{custom-call.2} parent=30 // loop_body
          %v121 = vld [vmem:[%s115] sm:$0xff]
          %122 = vst [vmem:[%s116] sm:$0xff] %v121
        $region43: #{custom-call.2} parent=30 // loop_footer
          %s123 = scalar_lea.vmem %s115, 8
          %s124 = scalar_lea.vmem %s116, 8
        $region44: #{custom-call.2} parent=30 // loop_footer_branch
          %125 = sbr.rel target = $region40
        $region45: #{custom-call.2} parent=30 // loop_exit
          _
      $region31: #{custom-call.2} parent=26 // pred_fallthru
        _
      %s126 = sand.u32 16, 7
      %s127 = sshll.u32 1, %s126
      %s128 = ssub.s32 %s127, 1
      %s129 = smul.u32 %s79, 128
      %s130 = sshra.s32 %s129, 4
      %s131 = scalar_lea.vmem [#allocation1], %s130
      %s132 = smul.u32 %s79, 128
      %s133 = sshra.s32 %s132, 4
      %s134 = scalar_lea.vmem %s1, %s133
      %v135 = vld [vmem:[%s134] sm:%s128]
      %136 = vst [vmem:[%s131] sm:%s128] %v135
    $region27: #{custom-call.2} parent=1 // pred_fallthru
      _
    %p138 = scmp.gt.s32.totalorder 16, 0
    // Predicated region
    $region46: #{custom-call.2} parent=1 // pred_check
      %p139 = pneg %p138
    $region47: #{custom-call.2} parent=1 // pred_check_branch
      %141 = sbr.rel (%p139) target = $region49
    $region48: #{custom-call.2} parent=1 // pred_region
      %s142 = sshra.s32 16, 3
      %p143 = scmp.gt.s32.totalorder %s142, 0
      // Predicated region
      $region50: #{custom-call.2} parent=48 // pred_check
        %p144 = pneg %p143
      $region51: #{custom-call.2} parent=48 // pred_check_branch
        %146 = sbr.rel (%p144) target = $region53
      $region52: #{custom-call.2} parent=48 // pred_region
        %s147 = ssub.s32 %s142, 1
        %s148 = smul.u32 %s147, 128
        %s149 = sshra.s32 %s148, 4
        %s150 = scalar_lea.vmem %s2, %s149
        %v151 = vld [vmem:[%s2] sm:$0xff]
        // While loop
        $region54: #{custom-call.2} parent=52 // loop_pre_header
          _
        $region55: #{custom-call.2} parent=52 // loop_header
          %s152 = sphi %s2, %s174
          %s153 = sphi [#allocation2], %s175
          %v154 = vphi %v151, %v176
          %s155 = ssub.s32 %s150, 64
          %p156 = scmp.gt.s32.totalorder %s152, %s155
        $region56: #{custom-call.2} parent=52 // loop_header_branch
          %158 = sbr.rel (%p156) target = $region60
        $region57: #{custom-call.2} parent=52 // loop_body
          %159 = vst [vmem:[%s153] sm:$0xff] %v154
          %v160 = vld [vmem:[%s152 + $0x8] sm:$0xff]
          %161 = vst [vmem:[%s153 + $0x8] sm:$0xff] %v160
          %v162 = vld [vmem:[%s152 + $0x10] sm:$0xff]
          %163 = vst [vmem:[%s153 + $0x10] sm:$0xff] %v162
          %v164 = vld [vmem:[%s152 + $0x18] sm:$0xff]
          %165 = vst [vmem:[%s153 + $0x18] sm:$0xff] %v164
          %v166 = vld [vmem:[%s152 + $0x20] sm:$0xff]
          %167 = vst [vmem:[%s153 + $0x20] sm:$0xff] %v166
          %v168 = vld [vmem:[%s152 + $0x28] sm:$0xff]
          %169 = vst [vmem:[%s153 + $0x28] sm:$0xff] %v168
          %v170 = vld [vmem:[%s152 + $0x30] sm:$0xff]
          %171 = vst [vmem:[%s153 + $0x30] sm:$0xff] %v170
          %v172 = vld [vmem:[%s152 + $0x38] sm:$0xff]
          %173 = vst [vmem:[%s153 + $0x38] sm:$0xff] %v172
        $region58: #{custom-call.2} parent=52 // loop_footer
          %s174 = scalar_lea.vmem %s152, 64
          %s175 = scalar_lea.vmem %s153, 64
          %v176 = vld [vmem:[%s152 + $0x40] sm:$0xff]
        $region59: #{custom-call.2} parent=52 // loop_footer_branch
          %177 = sbr.rel target = $region55
        $region60: #{custom-call.2} parent=52 // loop_exit
          _
        // While loop
        $region61: #{custom-call.2} parent=52 // loop_pre_header
          _
        $region62: #{custom-call.2} parent=52 // loop_header
          %s178 = sphi %s152, %s186
          %s179 = sphi %s153, %s187
          %v180 = vphi %v154, %v180
          %p181 = scmp.gt.s32.totalorder %s178, %s150
        $region63: #{custom-call.2} parent=52 // loop_header_branch
          %183 = sbr.rel (%p181) target = $region67
        $region64: #{custom-call.2} parent=52 // loop_body
          %v184 = vld [vmem:[%s178] sm:$0xff]
          %185 = vst [vmem:[%s179] sm:$0xff] %v184
        $region65: #{custom-call.2} parent=52 // loop_footer
          %s186 = scalar_lea.vmem %s178, 8
          %s187 = scalar_lea.vmem %s179, 8
        $region66: #{custom-call.2} parent=52 // loop_footer_branch
          %188 = sbr.rel target = $region62
        $region67: #{custom-call.2} parent=52 // loop_exit
          _
      $region53: #{custom-call.2} parent=48 // pred_fallthru
        _
      %s189 = sand.u32 16, 7
      %s190 = sshll.u32 1, %s189
      %s191 = ssub.s32 %s190, 1
      %s192 = smul.u32 %s142, 128
      %s193 = sshra.s32 %s192, 4
      %s194 = scalar_lea.vmem [#allocation2], %s193
      %s195 = smul.u32 %s142, 128
      %s196 = sshra.s32 %s195, 4
      %s197 = scalar_lea.vmem %s2, %s196
      %v198 = vld [vmem:[%s197] sm:%s191]
      %199 = vst [vmem:[%s194] sm:%s191] %v198
    $region49: #{custom-call.2} parent=1 // pred_fallthru
      _
    %p201 = scmp.gt.s32.totalorder 16, 0
    // Predicated region
    $region68: #{custom-call.2} parent=1 // pred_check
      %p202 = pneg %p201
    $region69: #{custom-call.2} parent=1 // pred_check_branch
      %204 = sbr.rel (%p202) target = $region71
    $region70: #{custom-call.2} parent=1 // pred_region
      %s205 = sshra.s32 16, 3
      %p206 = scmp.gt.s32.totalorder %s205, 0
      // Predicated region
      $region72: #{custom-call.2} parent=70 // pred_check
        %p207 = pneg %p206
      $region73: #{custom-call.2} parent=70 // pred_check_branch
        %209 = sbr.rel (%p207) target = $region75
      $region74: #{custom-call.2} parent=70 // pred_region
        %s210 = ssub.s32 %s205, 1
        %s211 = smul.u32 %s210, 128
        %s212 = sshra.s32 %s211, 4
        %s213 = scalar_lea.vmem %s3, %s212
        %v214 = vld [vmem:[%s3] sm:$0xff]
        // While loop
        $region76: #{custom-call.2} parent=74 // loop_pre_header
          _
        $region77: #{custom-call.2} parent=74 // loop_header
          %s215 = sphi %s3, %s237
          %s216 = sphi [#allocation3], %s238
          %v217 = vphi %v214, %v239
          %s218 = ssub.s32 %s213, 64
          %p219 = scmp.gt.s32.totalorder %s215, %s218
        $region78: #{custom-call.2} parent=74 // loop_header_branch
          %221 = sbr.rel (%p219) target = $region82
        $region79: #{custom-call.2} parent=74 // loop_body
          %222 = vst [vmem:[%s216] sm:$0xff] %v217
          %v223 = vld [vmem:[%s215 + $0x8] sm:$0xff]
          %224 = vst [vmem:[%s216 + $0x8] sm:$0xff] %v223
          %v225 = vld [vmem:[%s215 + $0x10] sm:$0xff]
          %226 = vst [vmem:[%s216 + $0x10] sm:$0xff] %v225
          %v227 = vld [vmem:[%s215 + $0x18] sm:$0xff]
          %228 = vst [vmem:[%s216 + $0x18] sm:$0xff] %v227
          %v229 = vld [vmem:[%s215 + $0x20] sm:$0xff]
          %230 = vst [vmem:[%s216 + $0x20] sm:$0xff] %v229
          %v231 = vld [vmem:[%s215 + $0x28] sm:$0xff]
          %232 = vst [vmem:[%s216 + $0x28] sm:$0xff] %v231
          %v233 = vld [vmem:[%s215 + $0x30] sm:$0xff]
          %234 = vst [vmem:[%s216 + $0x30] sm:$0xff] %v233
          %v235 = vld [vmem:[%s215 + $0x38] sm:$0xff]
          %236 = vst [vmem:[%s216 + $0x38] sm:$0xff] %v235
        $region80: #{custom-call.2} parent=74 // loop_footer
          %s237 = scalar_lea.vmem %s215, 64
          %s238 = scalar_lea.vmem %s216, 64
          %v239 = vld [vmem:[%s215 + $0x40] sm:$0xff]
        $region81: #{custom-call.2} parent=74 // loop_footer_branch
          %240 = sbr.rel target = $region77
        $region82: #{custom-call.2} parent=74 // loop_exit
          _
        // While loop
        $region83: #{custom-call.2} parent=74 // loop_pre_header
          _
        $region84: #{custom-call.2} parent=74 // loop_header
          %s241 = sphi %s215, %s249
          %s242 = sphi %s216, %s250
          %v243 = vphi %v217, %v243
          %p244 = scmp.gt.s32.totalorder %s241, %s213
        $region85: #{custom-call.2} parent=74 // loop_header_branch
          %246 = sbr.rel (%p244) target = $region89
        $region86: #{custom-call.2} parent=74 // loop_body
          %v247 = vld [vmem:[%s241] sm:$0xff]
          %248 = vst [vmem:[%s242] sm:$0xff] %v247
        $region87: #{custom-call.2} parent=74 // loop_footer
          %s249 = scalar_lea.vmem %s241, 8
          %s250 = scalar_lea.vmem %s242, 8
        $region88: #{custom-call.2} parent=74 // loop_footer_branch
          %251 = sbr.rel target = $region84
        $region89: #{custom-call.2} parent=74 // loop_exit
          _
      $region75: #{custom-call.2} parent=70 // pred_fallthru
        _
      %s252 = sand.u32 16, 7
      %s253 = sshll.u32 1, %s252
      %s254 = ssub.s32 %s253, 1
      %s255 = smul.u32 %s205, 128
      %s256 = sshra.s32 %s255, 4
      %s257 = scalar_lea.vmem [#allocation3], %s256
      %s258 = smul.u32 %s205, 128
      %s259 = sshra.s32 %s258, 4
      %s260 = scalar_lea.vmem %s3, %s259
      %v261 = vld [vmem:[%s260] sm:%s254]
      %262 = vst [vmem:[%s257] sm:%s254] %v261
    $region71: #{custom-call.2} parent=1 // pred_fallthru
      _
    %s263 = smov [#allocation12]
    %v264 = vld [vmem:[#allocation0] sm:$0xff]
    %265 = vst [vmem:[%s263] sm:$0xff] %v264
    %s266 = scalar_lea.vmem %s263, 8
    %s267 = scalar_lea.vmem [#allocation0], 8
    %v268 = vld [vmem:[%s267] sm:$0xff]
    %269 = vst [vmem:[%s266] sm:$0xff] %v268
    %s270 = smov [#allocation13]
    %v271 = vld [vmem:[#allocation1] sm:$0xff]
    %272 = vst [vmem:[%s270] sm:$0xff] %v271
    %s273 = scalar_lea.vmem %s270, 8
    %s274 = scalar_lea.vmem [#allocation1], 8
    %v275 = vld [vmem:[%s274] sm:$0xff]
    %276 = vst [vmem:[%s273] sm:$0xff] %v275
    %s277 = smov [#allocation14]
    %v278 = vld [vmem:[#allocation2] sm:$0xff]
    %279 = vst [vmem:[%s277] sm:$0xff] %v278
    %s280 = scalar_lea.vmem %s277, 8
    %s281 = scalar_lea.vmem [#allocation2], 8
    %v282 = vld [vmem:[%s281] sm:$0xff]
    %283 = vst [vmem:[%s280] sm:$0xff] %v282
    %s284 = smov [#allocation15]
    %v285 = vld [vmem:[#allocation3] sm:$0xff]
    %286 = vst [vmem:[%s284] sm:$0xff] %v285
    %s287 = scalar_lea.vmem %s284, 8
    %s288 = scalar_lea.vmem [#allocation3], 8
    %v289 = vld [vmem:[%s288] sm:$0xff]
    %290 = vst [vmem:[%s287] sm:$0xff] %v289
    %291 = vst [vmem:[#allocation8] sm:$0xff] 0.0
    %s292 = scalar_lea.vmem [#allocation8], 8
    %293 = vst [vmem:[%s292] sm:$0xff] 0.0
    %294 = vst [vmem:[#allocation9] sm:$0xff] 0.0
    %s295 = scalar_lea.vmem [#allocation9], 8
    %296 = vst [vmem:[%s295] sm:$0xff] 0.0
    %297 = vst [vmem:[#allocation10] sm:$0xff] 0.0
    %s298 = scalar_lea.vmem [#allocation10], 8
    %299 = vst [vmem:[%s298] sm:$0xff] 0.0
    %300 = vst [vmem:[#allocation11] sm:$0xff] 0.0
    %s301 = scalar_lea.vmem [#allocation11], 8
    %302 = vst [vmem:[%s301] sm:$0xff] 0.0
    %s303 = smov [#allocation8]
    %v304 = vlaneseq
    %v305 = vand.u32 %v304, 127
    %v306 = vmov %v305
    %v307 = vlaneseq
    %v308 = vshrl.u32 %v307, 7
    %v309 = vmov %v308
    %v310 = vld [vmem:[%s303] sm:$0xff]
    %vm313 = vcmp.eq.s32.totalorder %v309, %v306
    %v314 = vsel %vm313, 1.0, %v310
    %315 = vst [vmem:[%s303] sm:$0xff] %v314
    %s316 = scalar_lea.vmem %s303, 8
    %v317 = vld [vmem:[%s316] sm:$0xff]
    %v319 = vadd.s32 %v309, 8
    %vm320 = vcmp.eq.s32.totalorder %v319, %v306
    %v321 = vsel %vm320, 1.0, %v317
    %322 = vst [vmem:[%s316] sm:$0xff] %v321
    %s323 = smov [#allocation11]
    %v324 = vlaneseq
    %v325 = vand.u32 %v324, 127
    %v326 = vmov %v325
    %v327 = vlaneseq
    %v328 = vshrl.u32 %v327, 7
    %v329 = vmov %v328
    %v330 = vld [vmem:[%s323] sm:$0xff]
    %vm333 = vcmp.eq.s32.totalorder %v329, %v326
    %v334 = vsel %vm333, 1.0, %v330
    %335 = vst [vmem:[%s323] sm:$0xff] %v334
    %s336 = scalar_lea.vmem %s323, 8
    %v337 = vld [vmem:[%s336] sm:$0xff]
    %v339 = vadd.s32 %v329, 8
    %vm340 = vcmp.eq.s32.totalorder %v339, %v326
    %v341 = vsel %vm340, 1.0, %v337
    %342 = vst [vmem:[%s336] sm:$0xff] %v341
    // While loop
    $region90: #{custom-call.2} parent=1 // loop_pre_header
      _
    $region91: #{custom-call.2} parent=1 // loop_header
      %s344 = sphi 0, %s1242
      %v345 = vlaneseq
      %v346 = vand.u32 %v345, 127
      %v347 = vmov %v346
      %v348 = vlaneseq
      %v349 = vshrl.u32 %v348, 7
      %v350 = vmov %v349
      %s351 = smov [#allocation12]
      %v352 = vlaneseq
      %v353 = vand.u32 %v352, 127
      %vm354 = vcmp.ge.s32.totalorder %v353, 0
      %vm355 = vcmp.lt.s32.totalorder %v353, 16
      %vm356 = vmand %vm354, %vm355
      %v357 = vld [vmem:[%s351] sm:$0xff]
      %v358 = vsel %vm356, %v357, 0.0
      %v359 = vmul.f32 %v358, %v358
      %vm362 = vcmp.eq.s32.totalorder %v350, %v347
      %v363 = vsel %vm362, 0.0, %v359
      %s364 = scalar_lea.vmem %s351, 8
      %v365 = vld [vmem:[%s364] sm:$0xff]
      %v366 = vsel %vm356, %v365, 0.0
      %v367 = vmul.f32 %v366, %v366
      %v369 = vadd.s32 %v350, 8
      %vm370 = vcmp.eq.s32.totalorder %v369, %v347
      %v371 = vsel %vm370, 0.0, %v367
      %v372 = vadd.f32 %v363, %v371
      %v373 = vadd.f32 %v359, %v367
      %v374 = vlaneseq
      %v375 = vand.u32 %v374, 127
      %v376 = vmov %v375
      %v377 = vlaneseq
      %v378 = vshrl.u32 %v377, 7
      %v379 = vmov %v378
      %s380 = smov [#allocation13]
      %v381 = vlaneseq
      %v382 = vand.u32 %v381, 127
      %vm383 = vcmp.ge.s32.totalorder %v382, 0
      %vm384 = vcmp.lt.s32.totalorder %v382, 16
      %vm385 = vmand %vm383, %vm384
      %v386 = vld [vmem:[%s380] sm:$0xff]
      %v387 = vsel %vm385, %v386, 0.0
      %v388 = vmul.f32 %v387, %v387
      %v389 = vadd.f32 %v372, %v388
      %v390 = vadd.f32 %v373, %v388
      %s391 = scalar_lea.vmem %s380, 8
      %v392 = vld [vmem:[%s391] sm:$0xff]
      %v393 = vsel %vm385, %v392, 0.0
      %v394 = vmul.f32 %v393, %v393
      %v395 = vadd.f32 %v389, %v394
      %v396 = vadd.f32 %v390, %v394
      %v397 = vlaneseq
      %v398 = vand.u32 %v397, 127
      %v399 = vmov %v398
      %v400 = vlaneseq
      %v401 = vshrl.u32 %v400, 7
      %v402 = vmov %v401
      %s403 = smov [#allocation14]
      %v404 = vlaneseq
      %v405 = vand.u32 %v404, 127
      %vm406 = vcmp.ge.s32.totalorder %v405, 0
      %vm407 = vcmp.lt.s32.totalorder %v405, 16
      %vm408 = vmand %vm406, %vm407
      %v409 = vld [vmem:[%s403] sm:$0xff]
      %v410 = vsel %vm408, %v409, 0.0
      %v411 = vmul.f32 %v410, %v410
      %v412 = vadd.f32 %v395, %v411
      %v413 = vadd.f32 %v396, %v411
      %s414 = scalar_lea.vmem %s403, 8
      %v415 = vld [vmem:[%s414] sm:$0xff]
      %v416 = vsel %vm408, %v415, 0.0
      %v417 = vmul.f32 %v416, %v416
      %v418 = vadd.f32 %v412, %v417
      %v419 = vadd.f32 %v413, %v417
      %v420 = vlaneseq
      %v421 = vand.u32 %v420, 127
      %v422 = vmov %v421
      %v423 = vlaneseq
      %v424 = vshrl.u32 %v423, 7
      %v425 = vmov %v424
      %s426 = smov [#allocation15]
      %v427 = vlaneseq
      %v428 = vand.u32 %v427, 127
      %vm429 = vcmp.ge.s32.totalorder %v428, 0
      %vm430 = vcmp.lt.s32.totalorder %v428, 16
      %vm431 = vmand %vm429, %vm430
      %v432 = vld [vmem:[%s426] sm:$0xff]
      %v433 = vsel %vm431, %v432, 0.0
      %v434 = vmul.f32 %v433, %v433
      %vm437 = vcmp.eq.s32.totalorder %v425, %v422
      %v438 = vsel %vm437, 0.0, %v434
      %v439 = vadd.f32 %v418, %v438
      %v440 = vadd.f32 %v419, %v434
      %s441 = scalar_lea.vmem %s426, 8
      %v442 = vld [vmem:[%s441] sm:$0xff]
      %v443 = vsel %vm431, %v442, 0.0
      %v444 = vmul.f32 %v443, %v443
      %v446 = vadd.s32 %v425, 8
      %vm447 = vcmp.eq.s32.totalorder %v446, %v422
      %v448 = vsel %vm447, 0.0, %v444
      %v449 = vadd.f32 %v439, %v448
      %v450 = vadd.f32 %v440, %v444
      %451 = vadd.xlane.f32.xlu0 %v450
      %v452 = vpop.xlane.xlu0 %451
      %v453 = vrot.slane %v452, 4
      %v454 = vadd.f32 %v452, %v453
      %v455 = vrot.slane %v454, 2
      %v456 = vadd.f32 %v454, %v455
      %v457 = vrot.slane %v456, 1
      %v458 = vadd.f32 %v456, %v457
      %459 = vadd.xlane.f32.xlu0 %v449
      %v460 = vpop.xlane.xlu0 %459
      %v461 = vrot.slane %v460, 4
      %v462 = vadd.f32 %v460, %v461
      %v463 = vrot.slane %v462, 2
      %v464 = vadd.f32 %v462, %v463
      %v465 = vrot.slane %v464, 1
      %v466 = vadd.f32 %v464, %v465
      %s467 = vtos %v466
      %s468 = vtos %v458
      %s469 = smul.f32 1e-10, %s468
      %p470 = scmp.le.f32.partialorder %s467, %s469
      %p471 = scmp.ge.s32.totalorder %s344, 15
      %p472 = por %p470, %p471
    $region92: #{custom-call.2} parent=1 // loop_header_branch
      %1244 = sbr.rel (%p472) target = $region96
    $region93: #{custom-call.2} parent=1 // loop_body
      loop: start=0, step=1, limit=31
      $region97: #{custom-call.2} parent=93 // loop_pre_header
        _
      $region98: #{custom-call.2} parent=93 // loop_header
        %s474 = sphi 0, %s478
        %p475 = scmp.ge.s32.totalorder %s474, 31
      $region99: #{custom-call.2} parent=93 // loop_header_branch
        %477 = sbr.rel (%p475) target = $region103
      $region100: #{custom-call.2} parent=93 // loop_body
        #allocation16 [shape = 'f32[1024]{0}', space=vmem, size = 0x1000, scoped, tag = 'a_tl_diag vmem']
        #allocation17 [shape = 'f32[1024]{0}', space=vmem, size = 0x1000, scoped, tag = 'a_tr_diag vmem']
        #allocation18 [shape = 'f32[1024]{0}', space=vmem, size = 0x1000, scoped, tag = 'a_br_diag vmem']
        #allocation19 [shape = 'f32[1024]{0}', space=vmem, size = 0x1000, scoped, tag = 'rt1 vmem']
        #allocation20 [shape = 'f32[1024]{0}', space=vmem, size = 0x1000, scoped, tag = 'rt2 vmem']
        #allocation21 [shape = 'f32[1024]{0}', space=vmem, size = 0x1000, scoped, tag = 'c vmem']
        #allocation22 [shape = 'f32[1024]{0}', space=vmem, size = 0x1000, scoped, tag = 's vmem']
        #allocation23 [shape = 'f32[8192]{0}', space=vmem, size = 0x8000, scoped, tag = 'c broadcast']
        #allocation24 [shape = 'f32[8192]{0}', space=vmem, size = 0x8000, scoped, tag = 's broadcast']
        %s479 = smov [#allocation12]
        %s480 = smov [#allocation16]
        %v481 = vlaneseq
        %v482 = vand.u32 %v481, 127
        %v483 = vmov %v482
        %v484 = vlaneseq
        %v485 = vshrl.u32 %v484, 7
        %v486 = vmov %v485
        %v487 = vld [vmem:[%s479] sm:$0xff]
        %vm490 = vcmp.eq.s32.totalorder %v486, %v483
        %v491 = vsel %vm490, %v487, 0.0
        %s492 = scalar_lea.vmem %s479, 8
        %v493 = vld [vmem:[%s492] sm:$0xff]
        %v495 = vadd.s32 %v486, 8
        %vm496 = vcmp.eq.s32.totalorder %v495, %v483
        %v497 = vsel %vm496, %v493, %v491
        %v498 = vrot.slane %v497, 4
        %v499 = vadd.f32 %v497, %v498
        %v500 = vrot.slane %v499, 2
        %v501 = vadd.f32 %v499, %v500
        %v502 = vrot.slane %v501, 1
        %v503 = vadd.f32 %v501, %v502
        %504 = vst [vmem:[%s480] sm:$0x1] %v503
        %s505 = smov [#allocation13]
        %s506 = smov [#allocation17]
        %v507 = vlaneseq
        %v508 = vand.u32 %v507, 127
        %v509 = vmov %v508
        %v510 = vlaneseq
        %v511 = vshrl.u32 %v510, 7
        %v512 = vmov %v511
        %v513 = vld [vmem:[%s505] sm:$0xff]
        %vm516 = vcmp.eq.s32.totalorder %v512, %v509
        %v517 = vsel %vm516, %v513, 0.0
        %s518 = scalar_lea.vmem %s505, 8
        %v519 = vld [vmem:[%s518] sm:$0xff]
        %v521 = vadd.s32 %v512, 8
        %vm522 = vcmp.eq.s32.totalorder %v521, %v509
        %v523 = vsel %vm522, %v519, %v517
        %v524 = vrot.slane %v523, 4
        %v525 = vadd.f32 %v523, %v524
        %v526 = vrot.slane %v525, 2
        %v527 = vadd.f32 %v525, %v526
        %v528 = vrot.slane %v527, 1
        %v529 = vadd.f32 %v527, %v528
        %530 = vst [vmem:[%s506] sm:$0x1] %v529
        %s531 = smov [#allocation15]
        %s532 = smov [#allocation18]
        %v533 = vlaneseq
        %v534 = vand.u32 %v533, 127
        %v535 = vmov %v534
        %v536 = vlaneseq
        %v537 = vshrl.u32 %v536, 7
        %v538 = vmov %v537
        %v539 = vld [vmem:[%s531] sm:$0xff]
        %vm542 = vcmp.eq.s32.totalorder %v538, %v535
        %v543 = vsel %vm542, %v539, 0.0
        %s544 = scalar_lea.vmem %s531, 8
        %v545 = vld [vmem:[%s544] sm:$0xff]
        %v547 = vadd.s32 %v538, 8
        %vm548 = vcmp.eq.s32.totalorder %v547, %v535
        %v549 = vsel %vm548, %v545, %v543
        %v550 = vrot.slane %v549, 4
        %v551 = vadd.f32 %v549, %v550
        %v552 = vrot.slane %v551, 2
        %v553 = vadd.f32 %v551, %v552
        %v554 = vrot.slane %v553, 1
        %v555 = vadd.f32 %v553, %v554
        %556 = vst [vmem:[%s532] sm:$0x1] %v555
        %s557 = smov [#allocation21]
        %s558 = smov [#allocation22]
        %s559 = smov [#allocation16]
        %v560 = vld [vmem:[%s559] sm:$0xff]
        %s561 = smov [#allocation17]
        %v562 = vld [vmem:[%s561] sm:$0xff]
        %s563 = smov [#allocation18]
        %v564 = vld [vmem:[%s563] sm:$0xff]
        %v565 = vsub.f32 %v564, %v560
        %v566 = vmul.f32 2.0, %v562
        %v567 = vrcp.pop %v566
        %v568 = vmul.f32 %v565, %v567
        %vm569 = vcmp.ge.f32.partialorder %v568, 0.0
        %v570 = vmul.f32 %v568, %v568
        %v571 = vadd.f32 1.0, %v570
        %v572 = vrsqrt.pop %v571
        %v573 = vmul.f32 %v571, %v572
        %vm574 = vcmp.eq.f32.partialorder %v571, inf
        %v575 = vsel %vm574, %v571, %v573
        %vm576 = vcmp.eq.f32.partialorder %v571, 0.0
        %v577 = vand.u32 %v571, 2147483648
        %v578 = vsel %vm576, %v577, %v575
        %v579 = vxor.u32 %v578, 2147483648
        %v580 = vsel %vm569, %v578, %v579
        %v581 = vadd.f32 %v568, %v580
        %v582 = vrcp.pop %v581
        %v583 = vand.u32 2147483647, %v560
        %v584 = vand.u32 2147483647, %v562
        %v585 = vand.u32 2147483647, %v564
        %v586 = vmin.f32 %v583, %v585
        %v587 = vmul.f32 1.1920929e-08, %v586
        %vm588 = vcmp.le.f32.partialorder %v584, %v587
        %v589 = vsel %vm588, 0.0, %v582
        %v590 = vmul.f32 %v589, %v589
        %v591 = vadd.f32 1.0, %v590
        %v592 = vrsqrt.pop %v591
        %v593 = vmul.f32 %v589, %v592
        %v594 = vmul.f32 %v589, %v562
        %v595 = vsub.f32 %v560, %v594
        %v596 = vmul.f32 %v589, %v562
        %v597 = vadd.f32 %v564, %v596
        %s598 = smov [#allocation19]
        %599 = vst [vmem:[%s598] sm:$0xff] %v595
        %s600 = smov [#allocation20]
        %601 = vst [vmem:[%s600] sm:$0xff] %v597
        %s602 = smov %s557
        %603 = vst [vmem:[%s602] sm:$0xff] %v592
        %s604 = smov %s558
        %605 = vst [vmem:[%s604] sm:$0xff] %v593
        %s606 = smov [#allocation21]
        %v607 = vld [vmem:[%s606] ss:$0 sm:$0xff]
        %v608 = vlaneseq
        %v609 = vand.u32 %v608, 127
        %v610 = vmov %v609
        %v611 = vlaneseq
        %v612 = vshrl.u32 %v611, 7
        %v613 = vmov %v612
        %vm615 = vcmp.eq.s32.totalorder %v613, %v610
        %v616 = vsel %vm615, %v607, 0.0
        %617 = vadd.xlane.f32.xlu0 %v616
        %v618 = vpop.xlane.xlu0 %617
        %s619 = smov [#allocation23]
        %620 = vst [vmem:[%s619] sm:$0xff] %v618
        %s621 = smov [#allocation21]
        %v622 = vld [vmem:[%s621] ss:$0 sm:$0xff]
        %v623 = vlaneseq
        %v624 = vand.u32 %v623, 127
        %v625 = vmov %v624
        %v626 = vlaneseq
        %v627 = vshrl.u32 %v626, 7
        %v628 = vmov %v627
        %v629 = vadd.s32 %v628, 8
        %vm630 = vcmp.eq.s32.totalorder %v629, %v625
        %v631 = vsel %vm630, %v622, 0.0
        %632 = vadd.xlane.f32.xlu0 %v631
        %v633 = vpop.xlane.xlu0 %632
        %s634 = smov [#allocation23]
        %s635 = scalar_lea.vmem %s634, 8
        %636 = vst [vmem:[%s635] sm:$0xff] %v633
        %s637 = smov [#allocation22]
        %v638 = vld [vmem:[%s637] ss:$0 sm:$0xff]
        %v639 = vlaneseq
        %v640 = vand.u32 %v639, 127
        %v641 = vmov %v640
        %v642 = vlaneseq
        %v643 = vshrl.u32 %v642, 7
        %v644 = vmov %v643
        %vm646 = vcmp.eq.s32.totalorder %v644, %v641
        %v647 = vsel %vm646, %v638, 0.0
        %648 = vadd.xlane.f32.xlu0 %v647
        %v649 = vpop.xlane.xlu0 %648
        %s650 = smov [#allocation24]
        %651 = vst [vmem:[%s650] sm:$0xff] %v649
        %s652 = smov [#allocation22]
        %v653 = vld [vmem:[%s652] ss:$0 sm:$0xff]
        %v654 = vlaneseq
        %v655 = vand.u32 %v654, 127
        %v656 = vmov %v655
        %v657 = vlaneseq
        %v658 = vshrl.u32 %v657, 7
        %v659 = vmov %v658
        %v660 = vadd.s32 %v659, 8
        %vm661 = vcmp.eq.s32.totalorder %v660, %v656
        %v662 = vsel %vm661, %v653, 0.0
        %663 = vadd.xlane.f32.xlu0 %v662
        %v664 = vpop.xlane.xlu0 %663
        %s665 = smov [#allocation24]
        %s666 = scalar_lea.vmem %s665, 8
        %667 = vst [vmem:[%s666] sm:$0xff] %v664
        %s668 = smov [#allocation23]
        %v669 = vld [vmem:[%s668] sm:$0xff]
        %s670 = smov [#allocation24]
        %v671 = vld [vmem:[%s670] sm:$0xff]
        %s672 = smov [#allocation12]
        %s673 = smov [#allocation13]
        %s674 = smov [#allocation14]
        %s675 = smov [#allocation15]
        %v676 = vld [vmem:[%s672] sm:$0xff]
        %v677 = vld [vmem:[%s673] sm:$0xff]
        %v678 = vld [vmem:[%s674] sm:$0xff]
        %v679 = vld [vmem:[%s675] sm:$0xff]
        %v680 = vmul.f32 %v669, %v676
        %v681 = vmul.f32 %v671, %v678
        %v682 = vsub.f32 %v680, %v681
        %v683 = vmul.f32 %v669, %v677
        %v684 = vmul.f32 %v671, %v679
        %v685 = vsub.f32 %v683, %v684
        %v686 = vmul.f32 %v671, %v676
        %v687 = vmul.f32 %v669, %v678
        %v688 = vadd.f32 %v686, %v687
        %v689 = vmul.f32 %v671, %v677
        %v690 = vmul.f32 %v669, %v679
        %v691 = vadd.f32 %v689, %v690
        %692 = vst [vmem:[%s672] sm:$0xff] %v682
        %693 = vst [vmem:[%s673] sm:$0xff] %v685
        %694 = vst [vmem:[%s674] sm:$0xff] %v688
        %695 = vst [vmem:[%s675] sm:$0xff] %v691
        %s696 = smov [#allocation23]
        %s697 = scalar_lea.vmem %s696, 8
        %v698 = vld [vmem:[%s697] sm:$0xff]
        %s699 = smov [#allocation24]
        %s700 = scalar_lea.vmem %s699, 8
        %v701 = vld [vmem:[%s700] sm:$0xff]
        %s702 = smov [#allocation12]
        %s703 = scalar_lea.vmem %s702, 8
        %s704 = smov [#allocation13]
        %s705 = scalar_lea.vmem %s704, 8
        %s706 = smov [#allocation14]
        %s707 = scalar_lea.vmem %s706, 8
        %s708 = smov [#allocation15]
        %s709 = scalar_lea.vmem %s708, 8
        %v710 = vld [vmem:[%s703] sm:$0xff]
        %v711 = vld [vmem:[%s705] sm:$0xff]
        %v712 = vld [vmem:[%s707] sm:$0xff]
        %v713 = vld [vmem:[%s709] sm:$0xff]
        %v714 = vmul.f32 %v698, %v710
        %v715 = vmul.f32 %v701, %v712
        %v716 = vsub.f32 %v714, %v715
        %v717 = vmul.f32 %v698, %v711
        %v718 = vmul.f32 %v701, %v713
        %v719 = vsub.f32 %v717, %v718
        %v720 = vmul.f32 %v701, %v710
        %v721 = vmul.f32 %v698, %v712
        %v722 = vadd.f32 %v720, %v721
        %v723 = vmul.f32 %v701, %v711
        %v724 = vmul.f32 %v698, %v713
        %v725 = vadd.f32 %v723, %v724
        %726 = vst [vmem:[%s703] sm:$0xff] %v716
        %727 = vst [vmem:[%s705] sm:$0xff] %v719
        %728 = vst [vmem:[%s707] sm:$0xff] %v722
        %729 = vst [vmem:[%s709] sm:$0xff] %v725
        %s730 = smov [#allocation21]
        %v731 = vld [vmem:[%s730] ss:$0 sm:$0xff]
        %s732 = smov [#allocation22]
        %v733 = vld [vmem:[%s732] ss:$0 sm:$0xff]
        %s734 = smov [#allocation12]
        %s735 = smov [#allocation13]
        %s736 = smov [#allocation14]
        %s737 = smov [#allocation15]
        %v738 = vld [vmem:[%s734] sm:$0xff]
        %v739 = vld [vmem:[%s735] sm:$0xff]
        %v740 = vld [vmem:[%s736] sm:$0xff]
        %v741 = vld [vmem:[%s737] sm:$0xff]
        %v742 = vmul.f32 %v731, %v738
        %v743 = vmul.f32 %v733, %v739
        %v744 = vsub.f32 %v742, %v743
        %v745 = vmul.f32 %v733, %v738
        %v746 = vmul.f32 %v731, %v739
        %v747 = vadd.f32 %v745, %v746
        %v748 = vmul.f32 %v731, %v740
        %v749 = vmul.f32 %v733, %v741
        %v750 = vsub.f32 %v748, %v749
        %v751 = vmul.f32 %v733, %v740
        %v752 = vmul.f32 %v731, %v741
        %v753 = vadd.f32 %v751, %v752
        %754 = vst [vmem:[%s734] sm:$0xff] %v744
        %755 = vst [vmem:[%s735] sm:$0xff] %v747
        %756 = vst [vmem:[%s736] sm:$0xff] %v750
        %757 = vst [vmem:[%s737] sm:$0xff] %v753
        %s758 = smov [#allocation12]
        %s759 = scalar_lea.vmem %s758, 8
        %s760 = smov [#allocation13]
        %s761 = scalar_lea.vmem %s760, 8
        %s762 = smov [#allocation14]
        %s763 = scalar_lea.vmem %s762, 8
        %s764 = smov [#allocation15]
        %s765 = scalar_lea.vmem %s764, 8
        %v766 = vld [vmem:[%s759] sm:$0xff]
        %v767 = vld [vmem:[%s761] sm:$0xff]
        %v768 = vld [vmem:[%s763] sm:$0xff]
        %v769 = vld [vmem:[%s765] sm:$0xff]
        %v770 = vmul.f32 %v731, %v766
        %v771 = vmul.f32 %v733, %v767
        %v772 = vsub.f32 %v770, %v771
        %v773 = vmul.f32 %v733, %v766
        %v774 = vmul.f32 %v731, %v767
        %v775 = vadd.f32 %v773, %v774
        %v776 = vmul.f32 %v731, %v768
        %v777 = vmul.f32 %v733, %v769
        %v778 = vsub.f32 %v776, %v777
        %v779 = vmul.f32 %v733, %v768
        %v780 = vmul.f32 %v731, %v769
        %v781 = vadd.f32 %v779, %v780
        %782 = vst [vmem:[%s759] sm:$0xff] %v772
        %783 = vst [vmem:[%s761] sm:$0xff] %v775
        %784 = vst [vmem:[%s763] sm:$0xff] %v778
        %785 = vst [vmem:[%s765] sm:$0xff] %v781
        %s786 = smov [#allocation12]
        %s787 = smov [#allocation19]
        %v788 = vlaneseq
        %v789 = vand.u32 %v788, 127
        %v790 = vmov %v789
        %v791 = vlaneseq
        %v792 = vshrl.u32 %v791, 7
        %v793 = vmov %v792
        %v794 = vld [vmem:[%s787] ss:$0 sm:$0xff]
        %v795 = vld [vmem:[%s786] sm:$0xff]
        %vm798 = vcmp.eq.s32.totalorder %v793, %v790
        %v799 = vsel %vm798, %v794, %v795
        %800 = vst [vmem:[%s786] sm:$0xff] %v799
        %v801 = vld [vmem:[%s787] ss:$0 sm:$0xff]
        %s802 = scalar_lea.vmem %s786, 8
        %v803 = vld [vmem:[%s802] sm:$0xff]
        %v805 = vadd.s32 %v793, 8
        %vm806 = vcmp.eq.s32.totalorder %v805, %v790
        %v807 = vsel %vm806, %v801, %v803
        %808 = vst [vmem:[%s802] sm:$0xff] %v807
        %s809 = smov [#allocation13]
        %v810 = vlaneseq
        %v811 = vand.u32 %v810, 127
        %v812 = vmov %v811
        %v813 = vlaneseq
        %v814 = vshrl.u32 %v813, 7
        %v815 = vmov %v814
        %v816 = vld [vmem:[%s809] sm:$0xff]
        %vm819 = vcmp.eq.s32.totalorder %v815, %v812
        %v820 = vsel %vm819, 0.0, %v816
        %821 = vst [vmem:[%s809] sm:$0xff] %v820
        %s822 = scalar_lea.vmem %s809, 8
        %v823 = vld [vmem:[%s822] sm:$0xff]
        %v825 = vadd.s32 %v815, 8
        %vm826 = vcmp.eq.s32.totalorder %v825, %v812
        %v827 = vsel %vm826, 0.0, %v823
        %828 = vst [vmem:[%s822] sm:$0xff] %v827
        %s829 = smov [#allocation14]
        %v830 = vlaneseq
        %v831 = vand.u32 %v830, 127
        %v832 = vmov %v831
        %v833 = vlaneseq
        %v834 = vshrl.u32 %v833, 7
        %v835 = vmov %v834
        %v836 = vld [vmem:[%s829] sm:$0xff]
        %vm839 = vcmp.eq.s32.totalorder %v835, %v832
        %v840 = vsel %vm839, 0.0, %v836
        %841 = vst [vmem:[%s829] sm:$0xff] %v840
        %s842 = scalar_lea.vmem %s829, 8
        %v843 = vld [vmem:[%s842] sm:$0xff]
        %v845 = vadd.s32 %v835, 8
        %vm846 = vcmp.eq.s32.totalorder %v845, %v832
        %v847 = vsel %vm846, 0.0, %v843
        %848 = vst [vmem:[%s842] sm:$0xff] %v847
        %s849 = smov [#allocation15]
        %s850 = smov [#allocation20]
        %v851 = vlaneseq
        %v852 = vand.u32 %v851, 127
        %v853 = vmov %v852
        %v854 = vlaneseq
        %v855 = vshrl.u32 %v854, 7
        %v856 = vmov %v855
        %v857 = vld [vmem:[%s850] ss:$0 sm:$0xff]
        %v858 = vld [vmem:[%s849] sm:$0xff]
        %vm861 = vcmp.eq.s32.totalorder %v856, %v853
        %v862 = vsel %vm861, %v857, %v858
        %863 = vst [vmem:[%s849] sm:$0xff] %v862
        %v864 = vld [vmem:[%s850] ss:$0 sm:$0xff]
        %s865 = scalar_lea.vmem %s849, 8
        %v866 = vld [vmem:[%s865] sm:$0xff]
        %v868 = vadd.s32 %v856, 8
        %vm869 = vcmp.eq.s32.totalorder %v868, %v853
        %v870 = vsel %vm869, %v864, %v866
        %871 = vst [vmem:[%s865] sm:$0xff] %v870
        %s872 = smov [#allocation12]
        %s873 = smov [#allocation13]
        %v874 = vld [vmem:[%s873] sm:$0xff]
        %875 = vrot.lane.b32.xlu0 %v874, 1
        %v876 = vpop.permute.xlu0 %875
        %v877 = vld [vmem:[%s872] sm:$0xff]
        %v878 = vld [vmem:[%s872] sm:$0xff]
        %879 = vrot.lane.b32.xlu0 %v878, 1
        %v880 = vpop.permute.xlu0 %879
        %v881 = vlaneseq
        %v882 = vand.u32 %v881, 127
        %vm883 = vcmp.eq.s32.totalorder %v882, 0
        %v884 = vsel %vm883, %v878, %v880
        %v885 = vlaneseq
        %v886 = vand.u32 %v885, 127
        %vm887 = vcmp.eq.s32.totalorder %v886, 1
        %v888 = vsel %vm887, %v876, %v884
        %v889 = vlaneseq
        %v890 = vand.u32 %v889, 127
        %vm891 = vcmp.ge.s32.totalorder %v890, 0
        %vm892 = vcmp.lt.s32.totalorder %v890, 16
        %vm893 = vmand %vm891, %vm892
        %v894 = vsel %vm893, %v888, 0.0
        %v895 = vld [vmem:[%s873] sm:$0xff]
        %896 = vrot.lane.b32.xlu0 %v895, 127
        %v897 = vpop.permute.xlu0 %896
        %v898 = vlaneseq
        %v899 = vand.u32 %v898, 127
        %vm900 = vcmp.eq.s32.totalorder %v899, 15
        %v901 = vsel %vm900, %v877, %v897
        %s902 = smov [#allocation12]
        %s903 = scalar_lea.vmem %s902, 8
        %s904 = smov [#allocation13]
        %s905 = scalar_lea.vmem %s904, 8
        %v906 = vld [vmem:[%s905] sm:$0xff]
        %907 = vrot.lane.b32.xlu0 %v906, 1
        %v908 = vpop.permute.xlu0 %907
        %v909 = vld [vmem:[%s903] sm:$0xff]
        %v910 = vld [vmem:[%s903] sm:$0xff]
        %911 = vrot.lane.b32.xlu0 %v910, 1
        %v912 = vpop.permute.xlu0 %911
        %v913 = vlaneseq
        %v914 = vand.u32 %v913, 127
        %vm915 = vcmp.eq.s32.totalorder %v914, 0
        %v916 = vsel %vm915, %v910, %v912
        %v917 = vlaneseq
        %v918 = vand.u32 %v917, 127
        %vm919 = vcmp.eq.s32.totalorder %v918, 1
        %v920 = vsel %vm919, %v908, %v916
        %v921 = vlaneseq
        %v922 = vand.u32 %v921, 127
        %vm923 = vcmp.ge.s32.totalorder %v922, 0
        %vm924 = vcmp.lt.s32.totalorder %v922, 16
        %vm925 = vmand %vm923, %vm924
        %v926 = vsel %vm925, %v920, 0.0
        %v927 = vld [vmem:[%s905] sm:$0xff]
        %928 = vrot.lane.b32.xlu0 %v927, 127
        %v929 = vpop.permute.xlu0 %928
        %v930 = vlaneseq
        %v931 = vand.u32 %v930, 127
        %vm932 = vcmp.eq.s32.totalorder %v931, 15
        %v933 = vsel %vm932, %v909, %v929
        %934 = vst [vmem:[%s872] sm:$0xff] %v894
        %935 = vst [vmem:[%s873] sm:$0xff] %v901
        %936 = vst [vmem:[%s903] sm:$0xff] %v926
        %937 = vst [vmem:[%s905] sm:$0xff] %v933
        %s938 = smov [#allocation14]
        %s939 = smov [#allocation15]
        %v940 = vld [vmem:[%s939] sm:$0xff]
        %941 = vrot.lane.b32.xlu0 %v940, 1
        %v942 = vpop.permute.xlu0 %941
        %v943 = vld [vmem:[%s938] sm:$0xff]
        %v944 = vld [vmem:[%s938] sm:$0xff]
        %945 = vrot.lane.b32.xlu0 %v944, 1
        %v946 = vpop.permute.xlu0 %945
        %v947 = vlaneseq
        %v948 = vand.u32 %v947, 127
        %vm949 = vcmp.eq.s32.totalorder %v948, 0
        %v950 = vsel %vm949, %v944, %v946
        %v951 = vlaneseq
        %v952 = vand.u32 %v951, 127
        %vm953 = vcmp.eq.s32.totalorder %v952, 1
        %v954 = vsel %vm953, %v942, %v950
        %v955 = vlaneseq
        %v956 = vand.u32 %v955, 127
        %vm957 = vcmp.ge.s32.totalorder %v956, 0
        %vm958 = vcmp.lt.s32.totalorder %v956, 16
        %vm959 = vmand %vm957, %vm958
        %v960 = vsel %vm959, %v954, 0.0
        %v961 = vld [vmem:[%s939] sm:$0xff]
        %962 = vrot.lane.b32.xlu0 %v961, 127
        %v963 = vpop.permute.xlu0 %962
        %v964 = vlaneseq
        %v965 = vand.u32 %v964, 127
        %vm966 = vcmp.eq.s32.totalorder %v965, 15
        %v967 = vsel %vm966, %v943, %v963
        %s968 = smov [#allocation14]
        %s969 = scalar_lea.vmem %s968, 8
        %s970 = smov [#allocation15]
        %s971 = scalar_lea.vmem %s970, 8
        %v972 = vld [vmem:[%s971] sm:$0xff]
        %973 = vrot.lane.b32.xlu0 %v972, 1
        %v974 = vpop.permute.xlu0 %973
        %v975 = vld [vmem:[%s969] sm:$0xff]
        %v976 = vld [vmem:[%s969] sm:$0xff]
        %977 = vrot.lane.b32.xlu0 %v976, 1
        %v978 = vpop.permute.xlu0 %977
        %v979 = vlaneseq
        %v980 = vand.u32 %v979, 127
        %vm981 = vcmp.eq.s32.totalorder %v980, 0
        %v982 = vsel %vm981, %v976, %v978
        %v983 = vlaneseq
        %v984 = vand.u32 %v983, 127
        %vm985 = vcmp.eq.s32.totalorder %v984, 1
        %v986 = vsel %vm985, %v974, %v982
        %v987 = vlaneseq
        %v988 = vand.u32 %v987, 127
        %vm989 = vcmp.ge.s32.totalorder %v988, 0
        %vm990 = vcmp.lt.s32.totalorder %v988, 16
        %vm991 = vmand %vm989, %vm990
        %v992 = vsel %vm991, %v986, 0.0
        %v993 = vld [vmem:[%s971] sm:$0xff]
        %994 = vrot.lane.b32.xlu0 %v993, 127
        %v995 = vpop.permute.xlu0 %994
        %v996 = vlaneseq
        %v997 = vand.u32 %v996, 127
        %vm998 = vcmp.eq.s32.totalorder %v997, 15
        %v999 = vsel %vm998, %v975, %v995
        %1000 = vst [vmem:[%s938] sm:$0xff] %v960
        %1001 = vst [vmem:[%s939] sm:$0xff] %v967
        %1002 = vst [vmem:[%s969] sm:$0xff] %v992
        %1003 = vst [vmem:[%s971] sm:$0xff] %v999
        %s1004 = smov [#allocation12]
        %s1005 = smov [#allocation14]
        %v1006 = vld [vmem:[%s1004] ss:$0 sm:$0xff]
        %s1008 = scalar_lea.vmem %s1004, 4294967295
        %v1009 = vld [vmem:[%s1008] sm:$0xfe]
        %v1010 = vlaneseq
        %v1011 = vshrl.u32 %v1010, 7
        %vm1012 = vcmp.eq.s32.totalorder %v1011, 0
        %v1013 = vsel %vm1012, %v1006, %v1009
        %s1014 = scalar_lea.vmem %s1004, 7
        %v1015 = vld [vmem:[%s1014] ss:$0 sm:$0xff]
        %1016 = vst [vmem:[%s1004] sm:$0xff] %v1013
        %s1017 = scalar_lea.vmem %s1004, 8
        %s1019 = scalar_lea.vmem %s1017, 4294967295
        %v1020 = vld [vmem:[%s1019] sm:$0xfe]
        %v1021 = vlaneseq
        %v1022 = vshrl.u32 %v1021, 7
        %vm1023 = vcmp.eq.s32.totalorder %v1022, 0
        %v1024 = vsel %vm1023, %v1015, %v1020
        %s1025 = scalar_lea.vmem %s1017, 7
        %v1026 = vld [vmem:[%s1025] ss:$0 sm:$0xff]
        %1027 = vst [vmem:[%s1017] sm:$0xff] %v1024
        %v1028 = vld [vmem:[%s1005] ss:$0 sm:$0xff]
        %s1029 = scalar_lea.vmem %s1004, 1
        %1030 = vst [vmem:[%s1029] sm:$0x1] %v1028
        %s1031 = scalar_lea.vmem %s1005, 8
        %s1032 = scalar_lea.vmem %s1031, 1
        %v1033 = vld [vmem:[%s1032] sm:$0x7f]
        %v1034 = vlaneseq
        %v1035 = vshrl.u32 %v1034, 7
        %vm1036 = vcmp.eq.s32.totalorder %v1035, 7
        %v1037 = vsel %vm1036, %v1026, %v1033
        %v1038 = vld [vmem:[%s1031] ss:$0 sm:$0xff]
        %1039 = vst [vmem:[%s1031] sm:$0xff] %v1037
        %s1040 = scalar_lea.vmem %s1005, 1
        %v1041 = vld [vmem:[%s1040] sm:$0x7f]
        %v1042 = vlaneseq
        %v1043 = vshrl.u32 %v1042, 7
        %vm1044 = vcmp.eq.s32.totalorder %v1043, 7
        %v1045 = vsel %vm1044, %v1038, %v1041
        %v1046 = vld [vmem:[%s1005] ss:$0 sm:$0xff]
        %1047 = vst [vmem:[%s1005] sm:$0xff] %v1045
        %s1048 = smov [#allocation13]
        %s1049 = smov [#allocation15]
        %v1050 = vld [vmem:[%s1048] ss:$0 sm:$0xff]
        %s1052 = scalar_lea.vmem %s1048, 4294967295
        %v1053 = vld [vmem:[%s1052] sm:$0xfe]
        %v1054 = vlaneseq
        %v1055 = vshrl.u32 %v1054, 7
        %vm1056 = vcmp.eq.s32.totalorder %v1055, 0
        %v1057 = vsel %vm1056, %v1050, %v1053
        %s1058 = scalar_lea.vmem %s1048, 7
        %v1059 = vld [vmem:[%s1058] ss:$0 sm:$0xff]
        %1060 = vst [vmem:[%s1048] sm:$0xff] %v1057
        %s1061 = scalar_lea.vmem %s1048, 8
        %s1063 = scalar_lea.vmem %s1061, 4294967295
        %v1064 = vld [vmem:[%s1063] sm:$0xfe]
        %v1065 = vlaneseq
        %v1066 = vshrl.u32 %v1065, 7
        %vm1067 = vcmp.eq.s32.totalorder %v1066, 0
        %v1068 = vsel %vm1067, %v1059, %v1064
        %s1069 = scalar_lea.vmem %s1061, 7
        %v1070 = vld [vmem:[%s1069] ss:$0 sm:$0xff]
        %1071 = vst [vmem:[%s1061] sm:$0xff] %v1068
        %v1072 = vld [vmem:[%s1049] ss:$0 sm:$0xff]
        %s1073 = scalar_lea.vmem %s1048, 1
        %1074 = vst [vmem:[%s1073] sm:$0x1] %v1072
        %s1075 = scalar_lea.vmem %s1049, 8
        %s1076 = scalar_lea.vmem %s1075, 1
        %v1077 = vld [vmem:[%s1076] sm:$0x7f]
        %v1078 = vlaneseq
        %v1079 = vshrl.u32 %v1078, 7
        %vm1080 = vcmp.eq.s32.totalorder %v1079, 7
        %v1081 = vsel %vm1080, %v1070, %v1077
        %v1082 = vld [vmem:[%s1075] ss:$0 sm:$0xff]
        %1083 = vst [vmem:[%s1075] sm:$0xff] %v1081
        %s1084 = scalar_lea.vmem %s1049, 1
        %v1085 = vld [vmem:[%s1084] sm:$0x7f]
        %v1086 = vlaneseq
        %v1087 = vshrl.u32 %v1086, 7
        %vm1088 = vcmp.eq.s32.totalorder %v1087, 7
        %v1089 = vsel %vm1088, %v1082, %v1085
        %v1090 = vld [vmem:[%s1049] ss:$0 sm:$0xff]
        %1091 = vst [vmem:[%s1049] sm:$0xff] %v1089
        %s1092 = smov [#allocation23]
        %v1093 = vld [vmem:[%s1092] sm:$0xff]
        %s1094 = smov [#allocation24]
        %v1095 = vld [vmem:[%s1094] sm:$0xff]
        %s1096 = smov [#allocation8]
        %s1097 = smov [#allocation9]
        %s1098 = smov [#allocation10]
        %s1099 = smov [#allocation11]
        %v1100 = vld [vmem:[%s1096] sm:$0xff]
        %v1101 = vld [vmem:[%s1097] sm:$0xff]
        %v1102 = vld [vmem:[%s1098] sm:$0xff]
        %v1103 = vld [vmem:[%s1099] sm:$0xff]
        %v1104 = vmul.f32 %v1093, %v1100
        %v1105 = vmul.f32 %v1095, %v1102
        %v1106 = vsub.f32 %v1104, %v1105
        %v1107 = vmul.f32 %v1093, %v1101
        %v1108 = vmul.f32 %v1095, %v1103
        %v1109 = vsub.f32 %v1107, %v1108
        %v1110 = vmul.f32 %v1095, %v1100
        %v1111 = vmul.f32 %v1093, %v1102
        %v1112 = vadd.f32 %v1110, %v1111
        %v1113 = vmul.f32 %v1095, %v1101
        %v1114 = vmul.f32 %v1093, %v1103
        %v1115 = vadd.f32 %v1113, %v1114
        %1116 = vst [vmem:[%s1096] sm:$0xff] %v1106
        %1117 = vst [vmem:[%s1097] sm:$0xff] %v1109
        %1118 = vst [vmem:[%s1098] sm:$0xff] %v1112
        %1119 = vst [vmem:[%s1099] sm:$0xff] %v1115
        %s1120 = smov [#allocation23]
        %s1121 = scalar_lea.vmem %s1120, 8
        %v1122 = vld [vmem:[%s1121] sm:$0xff]
        %s1123 = smov [#allocation24]
        %s1124 = scalar_lea.vmem %s1123, 8
        %v1125 = vld [vmem:[%s1124] sm:$0xff]
        %s1126 = smov [#allocation8]
        %s1127 = scalar_lea.vmem %s1126, 8
        %s1128 = smov [#allocation9]
        %s1129 = scalar_lea.vmem %s1128, 8
        %s1130 = smov [#allocation10]
        %s1131 = scalar_lea.vmem %s1130, 8
        %s1132 = smov [#allocation11]
        %s1133 = scalar_lea.vmem %s1132, 8
        %v1134 = vld [vmem:[%s1127] sm:$0xff]
        %v1135 = vld [vmem:[%s1129] sm:$0xff]
        %v1136 = vld [vmem:[%s1131] sm:$0xff]
        %v1137 = vld [vmem:[%s1133] sm:$0xff]
        %v1138 = vmul.f32 %v1122, %v1134
        %v1139 = vmul.f32 %v1125, %v1136
        %v1140 = vsub.f32 %v1138, %v1139
        %v1141 = vmul.f32 %v1122, %v1135
        %v1142 = vmul.f32 %v1125, %v1137
        %v1143 = vsub.f32 %v1141, %v1142
        %v1144 = vmul.f32 %v1125, %v1134
        %v1145 = vmul.f32 %v1122, %v1136
        %v1146 = vadd.f32 %v1144, %v1145
        %v1147 = vmul.f32 %v1125, %v1135
        %v1148 = vmul.f32 %v1122, %v1137
        %v1149 = vadd.f32 %v1147, %v1148
        %1150 = vst [vmem:[%s1127] sm:$0xff] %v1140
        %1151 = vst [vmem:[%s1129] sm:$0xff] %v1143
        %1152 = vst [vmem:[%s1131] sm:$0xff] %v1146
        %1153 = vst [vmem:[%s1133] sm:$0xff] %v1149
        %s1154 = smov [#allocation8]
        %s1155 = smov [#allocation10]
        %v1156 = vld [vmem:[%s1154] ss:$0 sm:$0xff]
        %s1158 = scalar_lea.vmem %s1154, 4294967295
        %v1159 = vld [vmem:[%s1158] sm:$0xfe]
        %v1160 = vlaneseq
        %v1161 = vshrl.u32 %v1160, 7
        %vm1162 = vcmp.eq.s32.totalorder %v1161, 0
        %v1163 = vsel %vm1162, %v1156, %v1159
        %s1164 = scalar_lea.vmem %s1154, 7
        %v1165 = vld [vmem:[%s1164] ss:$0 sm:$0xff]
        %1166 = vst [vmem:[%s1154] sm:$0xff] %v1163
        %s1167 = scalar_lea.vmem %s1154, 8
        %s1169 = scalar_lea.vmem %s1167, 4294967295
        %v1170 = vld [vmem:[%s1169] sm:$0xfe]
        %v1171 = vlaneseq
        %v1172 = vshrl.u32 %v1171, 7
        %vm1173 = vcmp.eq.s32.totalorder %v1172, 0
        %v1174 = vsel %vm1173, %v1165, %v1170
        %s1175 = scalar_lea.vmem %s1167, 7
        %v1176 = vld [vmem:[%s1175] ss:$0 sm:$0xff]
        %1177 = vst [vmem:[%s1167] sm:$0xff] %v1174
        %v1178 = vld [vmem:[%s1155] ss:$0 sm:$0xff]
        %s1179 = scalar_lea.vmem %s1154, 1
        %1180 = vst [vmem:[%s1179] sm:$0x1] %v1178
        %s1181 = scalar_lea.vmem %s1155, 8
        %s1182 = scalar_lea.vmem %s1181, 1
        %v1183 = vld [vmem:[%s1182] sm:$0x7f]
        %v1184 = vlaneseq
        %v1185 = vshrl.u32 %v1184, 7
        %vm1186 = vcmp.eq.s32.totalorder %v1185, 7
        %v1187 = vsel %vm1186, %v1176, %v1183
        %v1188 = vld [vmem:[%s1181] ss:$0 sm:$0xff]
        %1189 = vst [vmem:[%s1181] sm:$0xff] %v1187
        %s1190 = scalar_lea.vmem %s1155, 1
        %v1191 = vld [vmem:[%s1190] sm:$0x7f]
        %v1192 = vlaneseq
        %v1193 = vshrl.u32 %v1192, 7
        %vm1194 = vcmp.eq.s32.totalorder %v1193, 7
        %v1195 = vsel %vm1194, %v1188, %v1191
        %v1196 = vld [vmem:[%s1155] ss:$0 sm:$0xff]
        %1197 = vst [vmem:[%s1155] sm:$0xff] %v1195
        %s1198 = smov [#allocation9]
        %s1199 = smov [#allocation11]
        %v1200 = vld [vmem:[%s1198] ss:$0 sm:$0xff]
        %s1202 = scalar_lea.vmem %s1198, 4294967295
        %v1203 = vld [vmem:[%s1202] sm:$0xfe]
        %v1204 = vlaneseq
        %v1205 = vshrl.u32 %v1204, 7
        %vm1206 = vcmp.eq.s32.totalorder %v1205, 0
        %v1207 = vsel %vm1206, %v1200, %v1203
        %s1208 = scalar_lea.vmem %s1198, 7
        %v1209 = vld [vmem:[%s1208] ss:$0 sm:$0xff]
        %1210 = vst [vmem:[%s1198] sm:$0xff] %v1207
        %s1211 = scalar_lea.vmem %s1198, 8
        %s1213 = scalar_lea.vmem %s1211, 4294967295
        %v1214 = vld [vmem:[%s1213] sm:$0xfe]
        %v1215 = vlaneseq
        %v1216 = vshrl.u32 %v1215, 7
        %vm1217 = vcmp.eq.s32.totalorder %v1216, 0
        %v1218 = vsel %vm1217, %v1209, %v1214
        %s1219 = scalar_lea.vmem %s1211, 7
        %v1220 = vld [vmem:[%s1219] ss:$0 sm:$0xff]
        %1221 = vst [vmem:[%s1211] sm:$0xff] %v1218
        %v1222 = vld [vmem:[%s1199] ss:$0 sm:$0xff]
        %s1223 = scalar_lea.vmem %s1198, 1
        %1224 = vst [vmem:[%s1223] sm:$0x1] %v1222
        %s1225 = scalar_lea.vmem %s1199, 8
        %s1226 = scalar_lea.vmem %s1225, 1
        %v1227 = vld [vmem:[%s1226] sm:$0x7f]
        %v1228 = vlaneseq
        %v1229 = vshrl.u32 %v1228, 7
        %vm1230 = vcmp.eq.s32.totalorder %v1229, 7
        %v1231 = vsel %vm1230, %v1220, %v1227
        %v1232 = vld [vmem:[%s1225] ss:$0 sm:$0xff]
        %1233 = vst [vmem:[%s1225] sm:$0xff] %v1231
        %s1234 = scalar_lea.vmem %s1199, 1
        %v1235 = vld [vmem:[%s1234] sm:$0x7f]
        %v1236 = vlaneseq
        %v1237 = vshrl.u32 %v1236, 7
        %vm1238 = vcmp.eq.s32.totalorder %v1237, 7
        %v1239 = vsel %vm1238, %v1232, %v1235
        %v1240 = vld [vmem:[%s1199] ss:$0 sm:$0xff]
        %1241 = vst [vmem:[%s1199] sm:$0xff] %v1239
      $region101: #{custom-call.2} parent=93 // loop_footer
        %s478 = sadd.s32 1, %s474
      $region102: #{custom-call.2} parent=93 // loop_footer_branch
        %473 = sbr.rel target = $region98
      $region103: #{custom-call.2} parent=93 // loop_exit
        _
      %s1242 = sadd.s32 %s344, 1
    $region94: #{custom-call.2} parent=1 // loop_footer
      _
    $region95: #{custom-call.2} parent=1 // loop_footer_branch
      %343 = sbr.rel target = $region91
    $region96: #{custom-call.2} parent=1 // loop_exit
      _
    %s1245 = smov [#allocation12]
    %s1246 = smov [#allocation4]
    %v1247 = vlaneseq
    %v1248 = vand.u32 %v1247, 127
    %v1249 = vmov %v1248
    %v1250 = vlaneseq
    %v1251 = vshrl.u32 %v1250, 7
    %v1252 = vmov %v1251
    %v1253 = vld [vmem:[%s1245] sm:$0xff]
    %vm1256 = vcmp.eq.s32.totalorder %v1252, %v1249
    %v1257 = vsel %vm1256, %v1253, 0.0
    %s1258 = scalar_lea.vmem %s1245, 8
    %v1259 = vld [vmem:[%s1258] sm:$0xff]
    %v1261 = vadd.s32 %v1252, 8
    %vm1262 = vcmp.eq.s32.totalorder %v1261, %v1249
    %v1263 = vsel %vm1262, %v1259, %v1257
    %v1264 = vrot.slane %v1263, 4
    %v1265 = vadd.f32 %v1263, %v1264
    %v1266 = vrot.slane %v1265, 2
    %v1267 = vadd.f32 %v1265, %v1266
    %v1268 = vrot.slane %v1267, 1
    %v1269 = vadd.f32 %v1267, %v1268
    %1270 = vst [vmem:[%s1246] sm:$0x1] %v1269
    %s1271 = smov [#allocation15]
    %s1272 = smov [#allocation6]
    %v1273 = vlaneseq
    %v1274 = vand.u32 %v1273, 127
    %v1275 = vmov %v1274
    %v1276 = vlaneseq
    %v1277 = vshrl.u32 %v1276, 7
    %v1278 = vmov %v1277
    %v1279 = vld [vmem:[%s1271] sm:$0xff]
    %vm1282 = vcmp.eq.s32.totalorder %v1278, %v1275
    %v1283 = vsel %vm1282, %v1279, 0.0
    %s1284 = scalar_lea.vmem %s1271, 8
    %v1285 = vld [vmem:[%s1284] sm:$0xff]
    %v1287 = vadd.s32 %v1278, 8
    %vm1288 = vcmp.eq.s32.totalorder %v1287, %v1275
    %v1289 = vsel %vm1288, %v1285, %v1283
    %v1290 = vrot.slane %v1289, 4
    %v1291 = vadd.f32 %v1289, %v1290
    %v1292 = vrot.slane %v1291, 2
    %v1293 = vadd.f32 %v1291, %v1292
    %v1294 = vrot.slane %v1293, 1
    %v1295 = vadd.f32 %v1293, %v1294
    %1296 = vst [vmem:[%s1272] sm:$0x1] %v1295
    %s1298 = sshll.u32 1, 1
    %s1299 = ssub.s32 %s1298, 1
    %v1301 = vld [vmem:[#allocation4] sm:%s1299]
    %s1302 = sshll.u32 1, 1
    %s1303 = ssub.s32 %s1302, 1
    %1304 = vst [vmem:[#allocation5] sm:%s1303] %v1301
    %s1306 = sshll.u32 1, 1
    %s1307 = ssub.s32 %s1306, 1
    %v1309 = vld [vmem:[#allocation6] sm:%s1307]
    %s1310 = sshll.u32 1, 1
    %s1311 = ssub.s32 %s1310, 1
    %1312 = vst [vmem:[#allocation7] sm:%s1311] %v1309
    // Predicated region
    $region104: #{custom-call.2} parent=1 // pred_check
      _
    $region105: #{custom-call.2} parent=1 // pred_check_branch
      %1314 = sbr.rel (0) target = $region107
    $region106: #{custom-call.2} parent=1 // pred_region
      %p1316 = scmp.gt.s32.totalorder 1, 0
      // Predicated region
      $region108: #{custom-call.2} parent=106 // pred_check
        %p1317 = pneg %p1316
      $region109: #{custom-call.2} parent=106 // pred_check_branch
        %1319 = sbr.rel (%p1317) target = $region111
      $region110: #{custom-call.2} parent=106 // pred_region
        %s1320 = sshra.s32 1, 3
        %p1321 = scmp.gt.s32.totalorder %s1320, 0
        // Predicated region
        $region112: #{custom-call.2} parent=110 // pred_check
          %p1322 = pneg %p1321
        $region113: #{custom-call.2} parent=110 // pred_check_branch
          %1324 = sbr.rel (%p1322) target = $region115
        $region114: #{custom-call.2} parent=110 // pred_region
          %s1325 = ssub.s32 %s1320, 1
          %s1326 = smul.u32 %s1325, 128
          %s1327 = sshra.s32 %s1326, 4
          %s1328 = scalar_lea.vmem [#allocation5], %s1327
          %v1329 = vld [vmem:[#allocation5] sm:$0xff]
          // While loop
          $region116: #{custom-call.2} parent=114 // loop_pre_header
            _
          $region117: #{custom-call.2} parent=114 // loop_header
            %s1330 = sphi [#allocation5], %s1352
            %s1331 = sphi %s4, %s1353
            %v1332 = vphi %v1329, %v1354
            %s1333 = ssub.s32 %s1328, 64
            %p1334 = scmp.gt.s32.totalorder %s1330, %s1333
          $region118: #{custom-call.2} parent=114 // loop_header_branch
            %1336 = sbr.rel (%p1334) target = $region122
          $region119: #{custom-call.2} parent=114 // loop_body
            %1337 = vst [vmem:[%s1331] sm:$0xff] %v1332
            %v1338 = vld [vmem:[%s1330 + $0x8] sm:$0xff]
            %1339 = vst [vmem:[%s1331 + $0x8] sm:$0xff] %v1338
            %v1340 = vld [vmem:[%s1330 + $0x10] sm:$0xff]
            %1341 = vst [vmem:[%s1331 + $0x10] sm:$0xff] %v1340
            %v1342 = vld [vmem:[%s1330 + $0x18] sm:$0xff]
            %1343 = vst [vmem:[%s1331 + $0x18] sm:$0xff] %v1342
            %v1344 = vld [vmem:[%s1330 + $0x20] sm:$0xff]
            %1345 = vst [vmem:[%s1331 + $0x20] sm:$0xff] %v1344
            %v1346 = vld [vmem:[%s1330 + $0x28] sm:$0xff]
            %1347 = vst [vmem:[%s1331 + $0x28] sm:$0xff] %v1346
            %v1348 = vld [vmem:[%s1330 + $0x30] sm:$0xff]
            %1349 = vst [vmem:[%s1331 + $0x30] sm:$0xff] %v1348
            %v1350 = vld [vmem:[%s1330 + $0x38] sm:$0xff]
            %1351 = vst [vmem:[%s1331 + $0x38] sm:$0xff] %v1350
          $region120: #{custom-call.2} parent=114 // loop_footer
            %s1352 = scalar_lea.vmem %s1330, 64
            %s1353 = scalar_lea.vmem %s1331, 64
            %v1354 = vld [vmem:[%s1330 + $0x40] sm:$0xff]
          $region121: #{custom-call.2} parent=114 // loop_footer_branch
            %1355 = sbr.rel target = $region117
          $region122: #{custom-call.2} parent=114 // loop_exit
            _
          // While loop
          $region123: #{custom-call.2} parent=114 // loop_pre_header
            _
          $region124: #{custom-call.2} parent=114 // loop_header
            %s1356 = sphi %s1330, %s1364
            %s1357 = sphi %s1331, %s1365
            %v1358 = vphi %v1332, %v1358
            %p1359 = scmp.gt.s32.totalorder %s1356, %s1328
          $region125: #{custom-call.2} parent=114 // loop_header_branch
            %1361 = sbr.rel (%p1359) target = $region129
          $region126: #{custom-call.2} parent=114 // loop_body
            %v1362 = vld [vmem:[%s1356] sm:$0xff]
            %1363 = vst [vmem:[%s1357] sm:$0xff] %v1362
          $region127: #{custom-call.2} parent=114 // loop_footer
            %s1364 = scalar_lea.vmem %s1356, 8
            %s1365 = scalar_lea.vmem %s1357, 8
          $region128: #{custom-call.2} parent=114 // loop_footer_branch
            %1366 = sbr.rel target = $region124
          $region129: #{custom-call.2} parent=114 // loop_exit
            _
        $region115: #{custom-call.2} parent=110 // pred_fallthru
          _
        %s1367 = sand.u32 1, 7
        %s1368 = sshll.u32 1, %s1367
        %s1369 = ssub.s32 %s1368, 1
        %s1370 = smul.u32 %s1320, 128
        %s1371 = sshra.s32 %s1370, 4
        %s1372 = scalar_lea.vmem %s4, %s1371
        %s1373 = smul.u32 %s1320, 128
        %s1374 = sshra.s32 %s1373, 4
        %s1375 = scalar_lea.vmem [#allocation5], %s1374
        %v1376 = vld [vmem:[%s1375] sm:%s1369]
        %1377 = vst [vmem:[%s1372] sm:%s1369] %v1376
      $region111: #{custom-call.2} parent=106 // pred_fallthru
        _
    $region107: #{custom-call.2} parent=1 // pred_fallthru
      _
    // Predicated region
    $region130: #{custom-call.2} parent=1 // pred_check
      _
    $region131: #{custom-call.2} parent=1 // pred_check_branch
      %1379 = sbr.rel (0) target = $region133
    $region132: #{custom-call.2} parent=1 // pred_region
      %p1381 = scmp.gt.s32.totalorder 1, 0
      // Predicated region
      $region134: #{custom-call.2} parent=132 // pred_check
        %p1382 = pneg %p1381
      $region135: #{custom-call.2} parent=132 // pred_check_branch
        %1384 = sbr.rel (%p1382) target = $region137
      $region136: #{custom-call.2} parent=132 // pred_region
        %s1385 = sshra.s32 1, 3
        %p1386 = scmp.gt.s32.totalorder %s1385, 0
        // Predicated region
        $region138: #{custom-call.2} parent=136 // pred_check
          %p1387 = pneg %p1386
        $region139: #{custom-call.2} parent=136 // pred_check_branch
          %1389 = sbr.rel (%p1387) target = $region141
        $region140: #{custom-call.2} parent=136 // pred_region
          %s1390 = ssub.s32 %s1385, 1
          %s1391 = smul.u32 %s1390, 128
          %s1392 = sshra.s32 %s1391, 4
          %s1393 = scalar_lea.vmem [#allocation7], %s1392
          %v1394 = vld [vmem:[#allocation7] sm:$0xff]
          // While loop
          $region142: #{custom-call.2} parent=140 // loop_pre_header
            _
          $region143: #{custom-call.2} parent=140 // loop_header
            %s1395 = sphi [#allocation7], %s1417
            %s1396 = sphi %s5, %s1418
            %v1397 = vphi %v1394, %v1419
            %s1398 = ssub.s32 %s1393, 64
            %p1399 = scmp.gt.s32.totalorder %s1395, %s1398
          $region144: #{custom-call.2} parent=140 // loop_header_branch
            %1401 = sbr.rel (%p1399) target = $region148
          $region145: #{custom-call.2} parent=140 // loop_body
            %1402 = vst [vmem:[%s1396] sm:$0xff] %v1397
            %v1403 = vld [vmem:[%s1395 + $0x8] sm:$0xff]
            %1404 = vst [vmem:[%s1396 + $0x8] sm:$0xff] %v1403
            %v1405 = vld [vmem:[%s1395 + $0x10] sm:$0xff]
            %1406 = vst [vmem:[%s1396 + $0x10] sm:$0xff] %v1405
            %v1407 = vld [vmem:[%s1395 + $0x18] sm:$0xff]
            %1408 = vst [vmem:[%s1396 + $0x18] sm:$0xff] %v1407
            %v1409 = vld [vmem:[%s1395 + $0x20] sm:$0xff]
            %1410 = vst [vmem:[%s1396 + $0x20] sm:$0xff] %v1409
            %v1411 = vld [vmem:[%s1395 + $0x28] sm:$0xff]
            %1412 = vst [vmem:[%s1396 + $0x28] sm:$0xff] %v1411
            %v1413 = vld [vmem:[%s1395 + $0x30] sm:$0xff]
            %1414 = vst [vmem:[%s1396 + $0x30] sm:$0xff] %v1413
            %v1415 = vld [vmem:[%s1395 + $0x38] sm:$0xff]
            %1416 = vst [vmem:[%s1396 + $0x38] sm:$0xff] %v1415
          $region146: #{custom-call.2} parent=140 // loop_footer
            %s1417 = scalar_lea.vmem %s1395, 64
            %s1418 = scalar_lea.vmem %s1396, 64
            %v1419 = vld [vmem:[%s1395 + $0x40] sm:$0xff]
          $region147: #{custom-call.2} parent=140 // loop_footer_branch
            %1420 = sbr.rel target = $region143
          $region148: #{custom-call.2} parent=140 // loop_exit
            _
          // While loop
          $region149: #{custom-call.2} parent=140 // loop_pre_header
            _
          $region150: #{custom-call.2} parent=140 // loop_header
            %s1421 = sphi %s1395, %s1429
            %s1422 = sphi %s1396, %s1430
            %v1423 = vphi %v1397, %v1423
            %p1424 = scmp.gt.s32.totalorder %s1421, %s1393
          $region151: #{custom-call.2} parent=140 // loop_header_branch
            %1426 = sbr.rel (%p1424) target = $region155
          $region152: #{custom-call.2} parent=140 // loop_body
            %v1427 = vld [vmem:[%s1421] sm:$0xff]
            %1428 = vst [vmem:[%s1422] sm:$0xff] %v1427
          $region153: #{custom-call.2} parent=140 // loop_footer
            %s1429 = scalar_lea.vmem %s1421, 8
            %s1430 = scalar_lea.vmem %s1422, 8
          $region154: #{custom-call.2} parent=140 // loop_footer_branch
            %1431 = sbr.rel target = $region150
          $region155: #{custom-call.2} parent=140 // loop_exit
            _
        $region141: #{custom-call.2} parent=136 // pred_fallthru
          _
        %s1432 = sand.u32 1, 7
        %s1433 = sshll.u32 1, %s1432
        %s1434 = ssub.s32 %s1433, 1
        %s1435 = smul.u32 %s1385, 128
        %s1436 = sshra.s32 %s1435, 4
        %s1437 = scalar_lea.vmem %s5, %s1436
        %s1438 = smul.u32 %s1385, 128
        %s1439 = sshra.s32 %s1438, 4
        %s1440 = scalar_lea.vmem [#allocation7], %s1439
        %v1441 = vld [vmem:[%s1440] sm:%s1434]
        %1442 = vst [vmem:[%s1437] sm:%s1434] %v1441
      $region137: #{custom-call.2} parent=132 // pred_fallthru
        _
    $region133: #{custom-call.2} parent=1 // pred_fallthru
      _
    %p1444 = scmp.gt.s32.totalorder 16, 0
    // Predicated region
    $region156: #{custom-call.2} parent=1 // pred_check
      %p1445 = pneg %p1444
    $region157: #{custom-call.2} parent=1 // pred_check_branch
      %1447 = sbr.rel (%p1445) target = $region159
    $region158: #{custom-call.2} parent=1 // pred_region
      %s1448 = sshra.s32 16, 3
      %p1449 = scmp.gt.s32.totalorder %s1448, 0
      // Predicated region
      $region160: #{custom-call.2} parent=158 // pred_check
        %p1450 = pneg %p1449
      $region161: #{custom-call.2} parent=158 // pred_check_branch
        %1452 = sbr.rel (%p1450) target = $region163
      $region162: #{custom-call.2} parent=158 // pred_region
        %s1453 = ssub.s32 %s1448, 1
        %s1454 = smul.u32 %s1453, 128
        %s1455 = sshra.s32 %s1454, 4
        %s1456 = scalar_lea.vmem [#allocation8], %s1455
        %v1457 = vld [vmem:[#allocation8] sm:$0xff]
        // While loop
        $region164: #{custom-call.2} parent=162 // loop_pre_header
          _
        $region165: #{custom-call.2} parent=162 // loop_header
          %s1458 = sphi [#allocation8], %s1480
          %s1459 = sphi %s6, %s1481
          %v1460 = vphi %v1457, %v1482
          %s1461 = ssub.s32 %s1456, 64
          %p1462 = scmp.gt.s32.totalorder %s1458, %s1461
        $region166: #{custom-call.2} parent=162 // loop_header_branch
          %1464 = sbr.rel (%p1462) target = $region170
        $region167: #{custom-call.2} parent=162 // loop_body
          %1465 = vst [vmem:[%s1459] sm:$0xff] %v1460
          %v1466 = vld [vmem:[%s1458 + $0x8] sm:$0xff]
          %1467 = vst [vmem:[%s1459 + $0x8] sm:$0xff] %v1466
          %v1468 = vld [vmem:[%s1458 + $0x10] sm:$0xff]
          %1469 = vst [vmem:[%s1459 + $0x10] sm:$0xff] %v1468
          %v1470 = vld [vmem:[%s1458 + $0x18] sm:$0xff]
          %1471 = vst [vmem:[%s1459 + $0x18] sm:$0xff] %v1470
          %v1472 = vld [vmem:[%s1458 + $0x20] sm:$0xff]
          %1473 = vst [vmem:[%s1459 + $0x20] sm:$0xff] %v1472
          %v1474 = vld [vmem:[%s1458 + $0x28] sm:$0xff]
          %1475 = vst [vmem:[%s1459 + $0x28] sm:$0xff] %v1474
          %v1476 = vld [vmem:[%s1458 + $0x30] sm:$0xff]
          %1477 = vst [vmem:[%s1459 + $0x30] sm:$0xff] %v1476
          %v1478 = vld [vmem:[%s1458 + $0x38] sm:$0xff]
          %1479 = vst [vmem:[%s1459 + $0x38] sm:$0xff] %v1478
        $region168: #{custom-call.2} parent=162 // loop_footer
          %s1480 = scalar_lea.vmem %s1458, 64
          %s1481 = scalar_lea.vmem %s1459, 64
          %v1482 = vld [vmem:[%s1458 + $0x40] sm:$0xff]
        $region169: #{custom-call.2} parent=162 // loop_footer_branch
          %1483 = sbr.rel target = $region165
        $region170: #{custom-call.2} parent=162 // loop_exit
          _
        // While loop
        $region171: #{custom-call.2} parent=162 // loop_pre_header
          _
        $region172: #{custom-call.2} parent=162 // loop_header
          %s1484 = sphi %s1458, %s1492
          %s1485 = sphi %s1459, %s1493
          %v1486 = vphi %v1460, %v1486
          %p1487 = scmp.gt.s32.totalorder %s1484, %s1456
        $region173: #{custom-call.2} parent=162 // loop_header_branch
          %1489 = sbr.rel (%p1487) target = $region177
        $region174: #{custom-call.2} parent=162 // loop_body
          %v1490 = vld [vmem:[%s1484] sm:$0xff]
          %1491 = vst [vmem:[%s1485] sm:$0xff] %v1490
        $region175: #{custom-call.2} parent=162 // loop_footer
          %s1492 = scalar_lea.vmem %s1484, 8
          %s1493 = scalar_lea.vmem %s1485, 8
        $region176: #{custom-call.2} parent=162 // loop_footer_branch
          %1494 = sbr.rel target = $region172
        $region177: #{custom-call.2} parent=162 // loop_exit
          _
      $region163: #{custom-call.2} parent=158 // pred_fallthru
        _
      %s1495 = sand.u32 16, 7
      %s1496 = sshll.u32 1, %s1495
      %s1497 = ssub.s32 %s1496, 1
      %s1498 = smul.u32 %s1448, 128
      %s1499 = sshra.s32 %s1498, 4
      %s1500 = scalar_lea.vmem %s6, %s1499
      %s1501 = smul.u32 %s1448, 128
      %s1502 = sshra.s32 %s1501, 4
      %s1503 = scalar_lea.vmem [#allocation8], %s1502
      %v1504 = vld [vmem:[%s1503] sm:%s1497]
      %1505 = vst [vmem:[%s1500] sm:%s1497] %v1504
    $region159: #{custom-call.2} parent=1 // pred_fallthru
      _
    %p1507 = scmp.gt.s32.totalorder 16, 0
    // Predicated region
    $region178: #{custom-call.2} parent=1 // pred_check
      %p1508 = pneg %p1507
    $region179: #{custom-call.2} parent=1 // pred_check_branch
      %1510 = sbr.rel (%p1508) target = $region181
    $region180: #{custom-call.2} parent=1 // pred_region
      %s1511 = sshra.s32 16, 3
      %p1512 = scmp.gt.s32.totalorder %s1511, 0
      // Predicated region
      $region182: #{custom-call.2} parent=180 // pred_check
        %p1513 = pneg %p1512
      $region183: #{custom-call.2} parent=180 // pred_check_branch
        %1515 = sbr.rel (%p1513) target = $region185
      $region184: #{custom-call.2} parent=180 // pred_region
        %s1516 = ssub.s32 %s1511, 1
        %s1517 = smul.u32 %s1516, 128
        %s1518 = sshra.s32 %s1517, 4
        %s1519 = scalar_lea.vmem [#allocation9], %s1518
        %v1520 = vld [vmem:[#allocation9] sm:$0xff]
        // While loop
        $region186: #{custom-call.2} parent=184 // loop_pre_header
          _
        $region187: #{custom-call.2} parent=184 // loop_header
          %s1521 = sphi [#allocation9], %s1543
          %s1522 = sphi %s7, %s1544
          %v1523 = vphi %v1520, %v1545
          %s1524 = ssub.s32 %s1519, 64
          %p1525 = scmp.gt.s32.totalorder %s1521, %s1524
        $region188: #{custom-call.2} parent=184 // loop_header_branch
          %1527 = sbr.rel (%p1525) target = $region192
        $region189: #{custom-call.2} parent=184 // loop_body
          %1528 = vst [vmem:[%s1522] sm:$0xff] %v1523
          %v1529 = vld [vmem:[%s1521 + $0x8] sm:$0xff]
          %1530 = vst [vmem:[%s1522 + $0x8] sm:$0xff] %v1529
          %v1531 = vld [vmem:[%s1521 + $0x10] sm:$0xff]
          %1532 = vst [vmem:[%s1522 + $0x10] sm:$0xff] %v1531
          %v1533 = vld [vmem:[%s1521 + $0x18] sm:$0xff]
          %1534 = vst [vmem:[%s1522 + $0x18] sm:$0xff] %v1533
          %v1535 = vld [vmem:[%s1521 + $0x20] sm:$0xff]
          %1536 = vst [vmem:[%s1522 + $0x20] sm:$0xff] %v1535
          %v1537 = vld [vmem:[%s1521 + $0x28] sm:$0xff]
          %1538 = vst [vmem:[%s1522 + $0x28] sm:$0xff] %v1537
          %v1539 = vld [vmem:[%s1521 + $0x30] sm:$0xff]
          %1540 = vst [vmem:[%s1522 + $0x30] sm:$0xff] %v1539
          %v1541 = vld [vmem:[%s1521 + $0x38] sm:$0xff]
          %1542 = vst [vmem:[%s1522 + $0x38] sm:$0xff] %v1541
        $region190: #{custom-call.2} parent=184 // loop_footer
          %s1543 = scalar_lea.vmem %s1521, 64
          %s1544 = scalar_lea.vmem %s1522, 64
          %v1545 = vld [vmem:[%s1521 + $0x40] sm:$0xff]
        $region191: #{custom-call.2} parent=184 // loop_footer_branch
          %1546 = sbr.rel target = $region187
        $region192: #{custom-call.2} parent=184 // loop_exit
          _
        // While loop
        $region193: #{custom-call.2} parent=184 // loop_pre_header
          _
        $region194: #{custom-call.2} parent=184 // loop_header
          %s1547 = sphi %s1521, %s1555
          %s1548 = sphi %s1522, %s1556
          %v1549 = vphi %v1523, %v1549
          %p1550 = scmp.gt.s32.totalorder %s1547, %s1519
        $region195: #{custom-call.2} parent=184 // loop_header_branch
          %1552 = sbr.rel (%p1550) target = $region199
        $region196: #{custom-call.2} parent=184 // loop_body
          %v1553 = vld [vmem:[%s1547] sm:$0xff]
          %1554 = vst [vmem:[%s1548] sm:$0xff] %v1553
        $region197: #{custom-call.2} parent=184 // loop_footer
          %s1555 = scalar_lea.vmem %s1547, 8
          %s1556 = scalar_lea.vmem %s1548, 8
        $region198: #{custom-call.2} parent=184 // loop_footer_branch
          %1557 = sbr.rel target = $region194
        $region199: #{custom-call.2} parent=184 // loop_exit
          _
      $region185: #{custom-call.2} parent=180 // pred_fallthru
        _
      %s1558 = sand.u32 16, 7
      %s1559 = sshll.u32 1, %s1558
      %s1560 = ssub.s32 %s1559, 1
      %s1561 = smul.u32 %s1511, 128
      %s1562 = sshra.s32 %s1561, 4
      %s1563 = scalar_lea.vmem %s7, %s1562
      %s1564 = smul.u32 %s1511, 128
      %s1565 = sshra.s32 %s1564, 4
      %s1566 = scalar_lea.vmem [#allocation9], %s1565
      %v1567 = vld [vmem:[%s1566] sm:%s1560]
      %1568 = vst [vmem:[%s1563] sm:%s1560] %v1567
    $region181: #{custom-call.2} parent=1 // pred_fallthru
      _
    %p1570 = scmp.gt.s32.totalorder 16, 0
    // Predicated region
    $region200: #{custom-call.2} parent=1 // pred_check
      %p1571 = pneg %p1570
    $region201: #{custom-call.2} parent=1 // pred_check_branch
      %1573 = sbr.rel (%p1571) target = $region203
    $region202: #{custom-call.2} parent=1 // pred_region
      %s1574 = sshra.s32 16, 3
      %p1575 = scmp.gt.s32.totalorder %s1574, 0
      // Predicated region
      $region204: #{custom-call.2} parent=202 // pred_check
        %p1576 = pneg %p1575
      $region205: #{custom-call.2} parent=202 // pred_check_branch
        %1578 = sbr.rel (%p1576) target = $region207
      $region206: #{custom-call.2} parent=202 // pred_region
        %s1579 = ssub.s32 %s1574, 1
        %s1580 = smul.u32 %s1579, 128
        %s1581 = sshra.s32 %s1580, 4
        %s1582 = scalar_lea.vmem [#allocation10], %s1581
        %v1583 = vld [vmem:[#allocation10] sm:$0xff]
        // While loop
        $region208: #{custom-call.2} parent=206 // loop_pre_header
          _
        $region209: #{custom-call.2} parent=206 // loop_header
          %s1584 = sphi [#allocation10], %s1606
          %s1585 = sphi %s8, %s1607
          %v1586 = vphi %v1583, %v1608
          %s1587 = ssub.s32 %s1582, 64
          %p1588 = scmp.gt.s32.totalorder %s1584, %s1587
        $region210: #{custom-call.2} parent=206 // loop_header_branch
          %1590 = sbr.rel (%p1588) target = $region214
        $region211: #{custom-call.2} parent=206 // loop_body
          %1591 = vst [vmem:[%s1585] sm:$0xff] %v1586
          %v1592 = vld [vmem:[%s1584 + $0x8] sm:$0xff]
          %1593 = vst [vmem:[%s1585 + $0x8] sm:$0xff] %v1592
          %v1594 = vld [vmem:[%s1584 + $0x10] sm:$0xff]
          %1595 = vst [vmem:[%s1585 + $0x10] sm:$0xff] %v1594
          %v1596 = vld [vmem:[%s1584 + $0x18] sm:$0xff]
          %1597 = vst [vmem:[%s1585 + $0x18] sm:$0xff] %v1596
          %v1598 = vld [vmem:[%s1584 + $0x20] sm:$0xff]
          %1599 = vst [vmem:[%s1585 + $0x20] sm:$0xff] %v1598
          %v1600 = vld [vmem:[%s1584 + $0x28] sm:$0xff]
          %1601 = vst [vmem:[%s1585 + $0x28] sm:$0xff] %v1600
          %v1602 = vld [vmem:[%s1584 + $0x30] sm:$0xff]
          %1603 = vst [vmem:[%s1585 + $0x30] sm:$0xff] %v1602
          %v1604 = vld [vmem:[%s1584 + $0x38] sm:$0xff]
          %1605 = vst [vmem:[%s1585 + $0x38] sm:$0xff] %v1604
        $region212: #{custom-call.2} parent=206 // loop_footer
          %s1606 = scalar_lea.vmem %s1584, 64
          %s1607 = scalar_lea.vmem %s1585, 64
          %v1608 = vld [vmem:[%s1584 + $0x40] sm:$0xff]
        $region213: #{custom-call.2} parent=206 // loop_footer_branch
          %1609 = sbr.rel target = $region209
        $region214: #{custom-call.2} parent=206 // loop_exit
          _
        // While loop
        $region215: #{custom-call.2} parent=206 // loop_pre_header
          _
        $region216: #{custom-call.2} parent=206 // loop_header
          %s1610 = sphi %s1584, %s1618
          %s1611 = sphi %s1585, %s1619
          %v1612 = vphi %v1586, %v1612
          %p1613 = scmp.gt.s32.totalorder %s1610, %s1582
        $region217: #{custom-call.2} parent=206 // loop_header_branch
          %1615 = sbr.rel (%p1613) target = $region221
        $region218: #{custom-call.2} parent=206 // loop_body
          %v1616 = vld [vmem:[%s1610] sm:$0xff]
          %1617 = vst [vmem:[%s1611] sm:$0xff] %v1616
        $region219: #{custom-call.2} parent=206 // loop_footer
          %s1618 = scalar_lea.vmem %s1610, 8
          %s1619 = scalar_lea.vmem %s1611, 8
        $region220: #{custom-call.2} parent=206 // loop_footer_branch
          %1620 = sbr.rel target = $region216
        $region221: #{custom-call.2} parent=206 // loop_exit
          _
      $region207: #{custom-call.2} parent=202 // pred_fallthru
        _
      %s1621 = sand.u32 16, 7
      %s1622 = sshll.u32 1, %s1621
      %s1623 = ssub.s32 %s1622, 1
      %s1624 = smul.u32 %s1574, 128
      %s1625 = sshra.s32 %s1624, 4
      %s1626 = scalar_lea.vmem %s8, %s1625
      %s1627 = smul.u32 %s1574, 128
      %s1628 = sshra.s32 %s1627, 4
      %s1629 = scalar_lea.vmem [#allocation10], %s1628
      %v1630 = vld [vmem:[%s1629] sm:%s1623]
      %1631 = vst [vmem:[%s1626] sm:%s1623] %v1630
    $region203: #{custom-call.2} parent=1 // pred_fallthru
      _
    %p1633 = scmp.gt.s32.totalorder 16, 0
    // Predicated region
    $region222: #{custom-call.2} parent=1 // pred_check
      %p1634 = pneg %p1633
    $region223: #{custom-call.2} parent=1 // pred_check_branch
      %1636 = sbr.rel (%p1634) target = $region225
    $region224: #{custom-call.2} parent=1 // pred_region
      %s1637 = sshra.s32 16, 3
      %p1638 = scmp.gt.s32.totalorder %s1637, 0
      // Predicated region
      $region226: #{custom-call.2} parent=224 // pred_check
        %p1639 = pneg %p1638
      $region227: #{custom-call.2} parent=224 // pred_check_branch
        %1641 = sbr.rel (%p1639) target = $region229
      $region228: #{custom-call.2} parent=224 // pred_region
        %s1642 = ssub.s32 %s1637, 1
        %s1643 = smul.u32 %s1642, 128
        %s1644 = sshra.s32 %s1643, 4
        %s1645 = scalar_lea.vmem [#allocation11], %s1644
        %v1646 = vld [vmem:[#allocation11] sm:$0xff]
        // While loop
        $region230: #{custom-call.2} parent=228 // loop_pre_header
          _
        $region231: #{custom-call.2} parent=228 // loop_header
          %s1647 = sphi [#allocation11], %s1669
          %s1648 = sphi %s9, %s1670
          %v1649 = vphi %v1646, %v1671
          %s1650 = ssub.s32 %s1645, 64
          %p1651 = scmp.gt.s32.totalorder %s1647, %s1650
        $region232: #{custom-call.2} parent=228 // loop_header_branch
          %1653 = sbr.rel (%p1651) target = $region236
        $region233: #{custom-call.2} parent=228 // loop_body
          %1654 = vst [vmem:[%s1648] sm:$0xff] %v1649
          %v1655 = vld [vmem:[%s1647 + $0x8] sm:$0xff]
          %1656 = vst [vmem:[%s1648 + $0x8] sm:$0xff] %v1655
          %v1657 = vld [vmem:[%s1647 + $0x10] sm:$0xff]
          %1658 = vst [vmem:[%s1648 + $0x10] sm:$0xff] %v1657
          %v1659 = vld [vmem:[%s1647 + $0x18] sm:$0xff]
          %1660 = vst [vmem:[%s1648 + $0x18] sm:$0xff] %v1659
          %v1661 = vld [vmem:[%s1647 + $0x20] sm:$0xff]
          %1662 = vst [vmem:[%s1648 + $0x20] sm:$0xff] %v1661
          %v1663 = vld [vmem:[%s1647 + $0x28] sm:$0xff]
          %1664 = vst [vmem:[%s1648 + $0x28] sm:$0xff] %v1663
          %v1665 = vld [vmem:[%s1647 + $0x30] sm:$0xff]
          %1666 = vst [vmem:[%s1648 + $0x30] sm:$0xff] %v1665
          %v1667 = vld [vmem:[%s1647 + $0x38] sm:$0xff]
          %1668 = vst [vmem:[%s1648 + $0x38] sm:$0xff] %v1667
        $region234: #{custom-call.2} parent=228 // loop_footer
          %s1669 = scalar_lea.vmem %s1647, 64
          %s1670 = scalar_lea.vmem %s1648, 64
          %v1671 = vld [vmem:[%s1647 + $0x40] sm:$0xff]
        $region235: #{custom-call.2} parent=228 // loop_footer_branch
          %1672 = sbr.rel target = $region231
        $region236: #{custom-call.2} parent=228 // loop_exit
          _
        // While loop
        $region237: #{custom-call.2} parent=228 // loop_pre_header
          _
        $region238: #{custom-call.2} parent=228 // loop_header
          %s1673 = sphi %s1647, %s1681
          %s1674 = sphi %s1648, %s1682
          %v1675 = vphi %v1649, %v1675
          %p1676 = scmp.gt.s32.totalorder %s1673, %s1645
        $region239: #{custom-call.2} parent=228 // loop_header_branch
          %1678 = sbr.rel (%p1676) target = $region243
        $region240: #{custom-call.2} parent=228 // loop_body
          %v1679 = vld [vmem:[%s1673] sm:$0xff]
          %1680 = vst [vmem:[%s1674] sm:$0xff] %v1679
        $region241: #{custom-call.2} parent=228 // loop_footer
          %s1681 = scalar_lea.vmem %s1673, 8
          %s1682 = scalar_lea.vmem %s1674, 8
        $region242: #{custom-call.2} parent=228 // loop_footer_branch
          %1683 = sbr.rel target = $region238
        $region243: #{custom-call.2} parent=228 // loop_exit
          _
      $region229: #{custom-call.2} parent=224 // pred_fallthru
        _
      %s1684 = sand.u32 16, 7
      %s1685 = sshll.u32 1, %s1684
      %s1686 = ssub.s32 %s1685, 1
      %s1687 = smul.u32 %s1637, 128
      %s1688 = sshra.s32 %s1687, 4
      %s1689 = scalar_lea.vmem %s9, %s1688
      %s1690 = smul.u32 %s1637, 128
      %s1691 = sshra.s32 %s1690, 4
      %s1692 = scalar_lea.vmem [#allocation11], %s1691
      %v1693 = vld [vmem:[%s1692] sm:%s1686]
      %1694 = vst [vmem:[%s1689] sm:%s1686] %v1693
    $region225: #{custom-call.2} parent=1 // pred_fallthru
      _
    // Predicated region
    $region244: #{custom-call.2} parent=1 // pred_check
      _
    $region245: #{custom-call.2} parent=1 // pred_check_branch
      %1696 = sbr.rel (0) target = $region247
    $region246: #{custom-call.2} parent=1 // pred_region
      _
    $region247: #{custom-call.2} parent=1 // pred_fallthru
      _
    // Predicated region
    $region248: #{custom-call.2} parent=1 // pred_check
      _
    $region249: #{custom-call.2} parent=1 // pred_check_branch
      %1698 = sbr.rel (0) target = $region251
    $region250: #{custom-call.2} parent=1 // pred_region
      _
    $region251: #{custom-call.2} parent=1 // pred_fallthru
      _

// kernel: deep_svdd_mlp_forward.2
$region0: #{deep_svdd_mlp_forward.2}
  #allocation0 [shape = 'u32[]', space=smem, size = 0x4, offset = 0x4, fixed_abs, tag = 'smem constant byte address 0x4 - core index']
  #allocation1 [shape = 'u32[144,128]{1,0:T(1,128)}', space=vmem, size = 0x12000, scoped, tag = 'internal scratch']
  %s0 = inlined_call_operand.vmem [shape: f32[64,16], index: 0, kind: input, shape index: {}]
  %s1 = inlined_call_operand.vmem [shape: bf16[16,512], index: 1, kind: input, shape index: {}]
  %s2 = inlined_call_operand.hbm [shape: bf16[512,128], index: 2, kind: input, shape index: {}]
  %s3 = inlined_call_operand.vmem [shape: f32[64,128], index: 3, kind: output, shape index: {}]
  %s4 = sld [smem:[#allocation0]]
  $region49: #{deep_svdd_mlp_forward.2} parent=0
    _
  %s6 = ssub.s32 1, %s4
  %s7 = scalar_select 0, %s6, %s4
  $region1: #{deep_svdd_mlp_forward.2} parent=0
    #allocation2 [shape = 'u8[131072]{0}', space=vmem, size = 0x20000, scoped, tag = 'input window, operand 2, single buffered']
    #allocation3 [shape = 's32[2]{0}', space=sflag, size = 0x8, scoped, tag = 'scoped memory for deep_svdd_mlp_forward.2']
    %8 = vsyncpa [#allocation3], 0
    loop: start=0, step=1, limit=4
    $region2: #{deep_svdd_mlp_forward.2} parent=1 // loop_pre_header
      _
    $region3: #{deep_svdd_mlp_forward.2} parent=1 // loop_header
      %s10 = sphi 0, %s14
      %p11 = scmp.ge.s32.totalorder %s10, 4
      %s20 = sphi 0, %s22
      %s23 = sphi 0, %s20
      %s24 = sphi 0, %s23
      %s40 = sphi 0, %s24
      %s44 = sphi 0, %s44
      %s46 = sphi 0, %s44
      %s47 = sphi 0, %s46
      %s61 = sphi 0, %s47
      %s65 = sphi 0, %s65
      %s67 = sphi 0, %s65
      %s68 = sphi 0, %s67
      %s82 = sphi 0, %s68
      %s88 = sphi 0, %s90
      %s91 = sphi 0, %s88
      %s92 = sphi 0, %s91
      %s108 = sphi 0, %s92
    $region4: #{deep_svdd_mlp_forward.2} parent=1 // loop_header_branch
      %13 = sbr.rel (%p11) target = $region8
    $region5: #{deep_svdd_mlp_forward.2} parent=1 // loop_body
      %s15 = ssub.s32 %s10, 1
      %s16 = ssub.s32 %s10, 2
      %s17 = sadd.s32 %s10, 1
      %s18 = ssub.s32 %s10, %s17
      %p19 = scmp.eq.s32.totalorder %s18, 0
      %s21 = sadd.s32 %s20, 1
      %s22 = scalar_select %p19, %s20, %s21
      %p25 = pneg %p19
      %p26 = scmp.eq.s32.totalorder %s10, 1
      %p27 = por %p25, %p26
      %p28 = scmp.ne.s32.totalorder %s20, %s23
      %p29 = scmp.eq.s32.totalorder %s10, 0
      %p30 = por %p28, %p29
      %p31 = scmp.ne.s32.totalorder %s20, %s23
      %p32 = scmp.eq.s32.totalorder %s15, 1
      %p33 = por %p31, %p32
      %p34 = scmp.ne.s32.totalorder %s23, %s24
      %p35 = scmp.eq.s32.totalorder %s15, 0
      %p36 = por %p34, %p35
      %p37 = scmp.ne.s32.totalorder %s23, %s24
      %p38 = scmp.eq.s32.totalorder %s16, 1
      %p39 = por %p37, %p38
      %p41 = scmp.ne.s32.totalorder %s24, %s40
      %p42 = scmp.eq.s32.totalorder %s16, 0
      %p43 = por %p41, %p42
      %s45 = sadd.s32 %s44, 1
      %p48 = scmp.eq.s32.totalorder %s10, 1
      %p49 = scmp.ne.s32.totalorder %s44, %s46
      %p50 = scmp.eq.s32.totalorder %s10, 0
      %p51 = por %p49, %p50
      %p52 = scmp.ne.s32.totalorder %s44, %s46
      %p53 = scmp.eq.s32.totalorder %s15, 1
      %p54 = por %p52, %p53
      %p55 = scmp.ne.s32.totalorder %s46, %s47
      %p56 = scmp.eq.s32.totalorder %s15, 0
      %p57 = por %p55, %p56
      %p58 = scmp.ne.s32.totalorder %s46, %s47
      %p59 = scmp.eq.s32.totalorder %s16, 1
      %p60 = por %p58, %p59
      %p62 = scmp.ne.s32.totalorder %s47, %s61
      %p63 = scmp.eq.s32.totalorder %s16, 0
      %p64 = por %p62, %p63
      %s66 = sadd.s32 %s65, 1
      %p69 = scmp.eq.s32.totalorder %s10, 1
      %p70 = scmp.ne.s32.totalorder %s65, %s67
      %p71 = scmp.eq.s32.totalorder %s10, 0
      %p72 = por %p70, %p71
      %p73 = scmp.ne.s32.totalorder %s65, %s67
      %p74 = scmp.eq.s32.totalorder %s15, 1
      %p75 = por %p73, %p74
      %p76 = scmp.ne.s32.totalorder %s67, %s68
      %p77 = scmp.eq.s32.totalorder %s15, 0
      %p78 = por %p76, %p77
      %p79 = scmp.ne.s32.totalorder %s67, %s68
      %p80 = scmp.eq.s32.totalorder %s16, 1
      %p81 = por %p79, %p80
      %p83 = scmp.ne.s32.totalorder %s68, %s82
      %p84 = scmp.eq.s32.totalorder %s16, 0
      %p85 = por %p83, %p84
      %s86 = ssub.s32 %s10, %s17
      %p87 = scmp.eq.s32.totalorder %s86, 0
      %s89 = sadd.s32 %s88, 1
      %s90 = scalar_select %p87, %s88, %s89
      %p93 = pneg %p87
      %p94 = scmp.eq.s32.totalorder %s10, 1
      %p95 = por %p93, %p94
      %p96 = scmp.ne.s32.totalorder %s88, %s91
      %p97 = scmp.eq.s32.totalorder %s10, 0
      %p98 = por %p96, %p97
      %p99 = scmp.ne.s32.totalorder %s88, %s91
      %p100 = scmp.eq.s32.totalorder %s15, 1
      %p101 = por %p99, %p100
      %p102 = scmp.ne.s32.totalorder %s91, %s92
      %p103 = scmp.eq.s32.totalorder %s15, 0
      %p104 = por %p102, %p103
      %p105 = scmp.ne.s32.totalorder %s91, %s92
      %p106 = scmp.eq.s32.totalorder %s16, 1
      %p107 = por %p105, %p106
      %p109 = scmp.ne.s32.totalorder %s92, %s108
      %p110 = scmp.eq.s32.totalorder %s16, 0
      %p111 = por %p109, %p110
      %p112 = scmp.le.s32.totalorder 1, %s10
      %p113 = scmp.lt.s32.totalorder %s10, 3
      %p114 = pnand %p112, %p113
      %p115 = pneg %p114
      // Predicated region
      $region9: #{deep_svdd_mlp_forward.2} parent=5 // pred_check
        _
      $region10: #{deep_svdd_mlp_forward.2} parent=5 // pred_check_branch
        %117 = sbr.rel (%p114) target = $region12
      $region11: #{deep_svdd_mlp_forward.2} parent=5 // pred_region
        %s118 = ssub.s32 %s10, 1
        // Predicated region
        $region13: #{deep_svdd_mlp_forward.2} parent=11 // pred_check
          %p119 = pneg %p57
        $region14: #{deep_svdd_mlp_forward.2} parent=11 // pred_check_branch
          %121 = sbr.rel (%p119) target = $region16
        $region15: #{deep_svdd_mlp_forward.2} parent=11 // pred_region
          _
        $region16: #{deep_svdd_mlp_forward.2} parent=11 // pred_fallthru
          _
        // Predicated region
        $region17: #{deep_svdd_mlp_forward.2} parent=11 // pred_check
          %p122 = pneg %p78
        $region18: #{deep_svdd_mlp_forward.2} parent=11 // pred_check_branch
          %124 = sbr.rel (%p122) target = $region20
        $region19: #{deep_svdd_mlp_forward.2} parent=11 // pred_region
          %s126 = ssub.s32 4096, 4096
          %127 = vsyncadd [#allocation3], %s126
          %s128 = sshll.u32 [#allocation2], 4
          %s129 = int_to_ptr.vmem [resolvable:$true] %s128
          %134 = dma.hbm_to_vmem [thread:$0]  %s2, 4096, %s129, [#allocation3], 64, 64, 4
        $region20: #{deep_svdd_mlp_forward.2} parent=11 // pred_fallthru
          _
      $region12: #{deep_svdd_mlp_forward.2} parent=5 // pred_fallthru
        _
      %p135 = scmp.lt.s32.totalorder %s10, 2
      // Predicated region
      $region21: #{deep_svdd_mlp_forward.2} parent=5 // pred_check
        %p136 = pneg %p135
      $region22: #{deep_svdd_mlp_forward.2} parent=5 // pred_check_branch
        %138 = sbr.rel (%p136) target = $region24
      $region23: #{deep_svdd_mlp_forward.2} parent=5 // pred_region
        // Predicated region
        $region25: #{deep_svdd_mlp_forward.2} parent=23 // pred_check
          %p139 = pneg %p30
        $region26: #{deep_svdd_mlp_forward.2} parent=23 // pred_check_branch
          %141 = sbr.rel (%p139) target = $region28
        $region27: #{deep_svdd_mlp_forward.2} parent=23 // pred_region
          %s142 = smul.u32 4, %s10
          %p143 = scmp.lt.s32.totalorder %s142, 7
          %s144 = scalar_select %p143, %s142, 7
          %s145 = smul.addr %s144, 8
          %s146 = scalar_lea.vmem %s0, %s145
          %s147 = smul.u32 4, %s10
        $region28: #{deep_svdd_mlp_forward.2} parent=23 // pred_fallthru
          _
      $region24: #{deep_svdd_mlp_forward.2} parent=5 // pred_fallthru
        _
      %p148 = scmp.le.s32.totalorder 1, %s10
      %p149 = scmp.lt.s32.totalorder %s10, 3
      %p150 = pnand %p148, %p149
      %p151 = pneg %p150
      // Predicated region
      $region29: #{deep_svdd_mlp_forward.2} parent=5 // pred_check
        _
      $region30: #{deep_svdd_mlp_forward.2} parent=5 // pred_check_branch
        %153 = sbr.rel (%p150) target = $region32
      $region31: #{deep_svdd_mlp_forward.2} parent=5 // pred_region
        %s154 = ssub.s32 %s10, 1
        // Predicated region
        $region33: #{deep_svdd_mlp_forward.2} parent=31 // pred_check
          %p155 = pneg %p78
        $region34: #{deep_svdd_mlp_forward.2} parent=31 // pred_check_branch
          %157 = sbr.rel (%p155) target = $region36
        $region35: #{deep_svdd_mlp_forward.2} parent=31 // pred_region
          %158 = dma.done [#allocation3], 4096
        $region36: #{deep_svdd_mlp_forward.2} parent=31 // pred_fallthru
          _
        %s159 = smul.u32 4, %s15
        %p160 = scmp.lt.s32.totalorder %s159, 7
        %s161 = scalar_select %p160, %s159, 7
        %s162 = smul.addr %s161, 8
        %s163 = scalar_lea.vmem %s0, %s162
        %p164 = pneg %p36
        %p165 = pneg %p33
        %p166 = pneg %p57
        %p167 = pneg %p54
        %p168 = pneg %p78
        %p169 = pneg %p75
        %p170 = pneg %p104
        %p171 = pneg %p101
        %s172 = smul.u32 4, %s15
        %p173 = scmp.lt.s32.totalorder %s172, 7
        %s174 = scalar_select %p173, %s172, 7
        %s175 = smul.addr %s174, 8
        %s176 = scalar_lea.vmem %s3, %s175
        %s177 = smul.u32 4, %s15
        %p178 = scmp.lt.s32.totalorder %s177, 7
        %s179 = scalar_select %p178, %s177, 7
        %s180 = smul.addr %s179, 8
        %s181 = scalar_lea.vmem %s0, %s180
        %s182 = smul.u32 4, %s15
        %s183 = smul.u32 4, %s15
        %p184 = scmp.lt.s32.totalorder %s183, 7
        %s185 = scalar_select %p184, %s183, 7
        %s186 = smul.addr %s185, 8
        %s187 = scalar_lea.vmem %s3, %s186
        %s188 = smul.u32 4, %s15
        %v190 = vld [vmem:[%s181] sm:$0xff]
        %v191 = vld [vmem:[%s181 + $0x8] sm:$0xff]
        %v192 = vld [vmem:[%s181 + $0x10] sm:$0xff]
        %v193 = vld [vmem:[%s181 + $0x18] sm:$0xff]
        %v194 = vpack.c.bf16 %v191, %v190
        %v195 = vpack.c.bf16 %v193, %v192
        %v196 = vld [vmem:[%s1] sm:$0xff]
        %v197 = vld [vmem:[%s1 + $0x8] sm:$0xff]
        %v198 = vld [vmem:[%s1 + $0x10] sm:$0xff]
        %v199 = vld [vmem:[%s1 + $0x18] sm:$0xff]
        %v204 = vunpack.c.l.b16 %v196
        %v205 = vunpack.c.h.b16 %v196
        %v206 = vunpack.c.l.b16 %v197
        %v207 = vunpack.c.h.b16 %v197
        %v208 = vunpack.c.l.b16 %v198
        %v209 = vunpack.c.h.b16 %v198
        %v210 = vunpack.c.l.b16 %v199
        %v211 = vunpack.c.h.b16 %v199
        %v212 = vpack.c.b16 %v208, %v204
        %v213 = vpack.c.b16 %v209, %v205
        %v214 = vpack.c.b16 %v210, %v206
        %v215 = vpack.c.b16 %v211, %v207
        %vm220 = vcmask 130048
        %v222 = vsel %vm220, %v194, 0
        %v225 = vsel %vm220, %v195, 0
        %227 = vmatprep.subr.bf16.mxu0 0
        %228 = vmatpush1.bf16.msra.mxu0 0
        %229 = vmatprep.subr.bf16.mxu0 0
        %230 = vmatpush1.bf16.msra.mxu0 0
        %231 = vmatprep.subr.bf16.mxu0 0
        %232 = vmatpush1.bf16.msra.mxu0 0
        %233 = vmatprep.subr.bf16.mxu0 0
        %234 = vmatpush1.bf16.msra.mxu0 0
        %235 = vmatprep.subr.bf16.mxu0 0
        %236 = vmatpush1.bf16.msra.mxu0 0
        %237 = vmatprep.subr.bf16.mxu0 0
        %238 = vmatpush1.bf16.msra.mxu0 0
        %239 = vmatprep.subr.bf16.mxu0 0
        %240 = vmatpush1.bf16.msra.mxu0 0
        %241 = vmatprep.subr.bf16.mxu0 %v213
        %242 = vmatpush1.bf16.msra.mxu0 %v212
        %243 = vmatprep.subr.bf16.mxu0 0
        %244 = vmatpush2.bf16.msra.mxu0 0
        %245 = vmatprep.subr.bf16.mxu0 0
        %246 = vmatpush2.bf16.msra.mxu0 0
        %247 = vmatprep.subr.bf16.mxu0 0
        %248 = vmatpush2.bf16.msra.mxu0 0
        %249 = vmatprep.subr.bf16.mxu0 0
        %250 = vmatpush2.bf16.msra.mxu0 0
        %251 = vmatprep.subr.bf16.mxu0 0
        %252 = vmatpush2.bf16.msra.mxu0 0
        %253 = vmatprep.subr.bf16.mxu0 0
        %254 = vmatpush2.bf16.msra.mxu0 0
        %255 = vmatprep.subr.bf16.mxu0 0
        %256 = vmatpush2.bf16.msra.mxu0 0
        %257 = vmatprep.subr.bf16.mxu0 0
        %258 = vmatpush2.bf16.msra.mxu0 0
        %259 = vmatprep.mubr.bf16.mxu0 0
        %260 = vmatmul.mubr.bf16.gmra.mxu0 %v222
        %v261 = vpop.f32.mrf.mxu0
        %v262 = vadd.f32 0.0, %v261
        %v263 = vpop.f32.mrf.mxu0
        %v264 = vadd.f32 0.0, %v263
        %v265 = vpop.f32.mrf.mxu0
        %v266 = vadd.f32 0.0, %v265
        %v267 = vpop.f32.mrf.mxu0
        %v268 = vadd.f32 0.0, %v267
        %269 = vmatprep.mubr.bf16.mxu0 0
        %270 = vmatmul.mubr.bf16.gmra.mxu0 %v225
        %v271 = vpop.f32.mrf.mxu0
        %v272 = vadd.f32 0.0, %v271
        %v273 = vpop.f32.mrf.mxu0
        %v274 = vadd.f32 0.0, %v273
        %v275 = vpop.f32.mrf.mxu0
        %v276 = vadd.f32 0.0, %v275
        %v277 = vpop.f32.mrf.mxu0
        %v278 = vadd.f32 0.0, %v277
        %279 = vdwg.mxu0
        %280 = vmatprep.subr.bf16.mxu0 0
        %281 = vmatpush1.bf16.msra.mxu0 0
        %282 = vmatprep.subr.bf16.mxu0 0
        %283 = vmatpush1.bf16.msra.mxu0 0
        %284 = vmatprep.subr.bf16.mxu0 0
        %285 = vmatpush1.bf16.msra.mxu0 0
        %286 = vmatprep.subr.bf16.mxu0 0
        %287 = vmatpush1.bf16.msra.mxu0 0
        %288 = vmatprep.subr.bf16.mxu0 0
        %289 = vmatpush1.bf16.msra.mxu0 0
        %290 = vmatprep.subr.bf16.mxu0 0
        %291 = vmatpush1.bf16.msra.mxu0 0
        %292 = vmatprep.subr.bf16.mxu0 0
        %293 = vmatpush1.bf16.msra.mxu0 0
        %294 = vmatprep.subr.bf16.mxu0 %v215
        %295 = vmatpush1.bf16.msra.mxu0 %v214
        %296 = vmatprep.subr.bf16.mxu0 0
        %297 = vmatpush2.bf16.msra.mxu0 0
        %298 = vmatprep.subr.bf16.mxu0 0
        %299 = vmatpush2.bf16.msra.mxu0 0
        %300 = vmatprep.subr.bf16.mxu0 0
        %301 = vmatpush2.bf16.msra.mxu0 0
        %302 = vmatprep.subr.bf16.mxu0 0
        %303 = vmatpush2.bf16.msra.mxu0 0
        %304 = vmatprep.subr.bf16.mxu0 0
        %305 = vmatpush2.bf16.msra.mxu0 0
        %306 = vmatprep.subr.bf16.mxu0 0
        %307 = vmatpush2.bf16.msra.mxu0 0
        %308 = vmatprep.subr.bf16.mxu0 0
        %309 = vmatpush2.bf16.msra.mxu0 0
        %310 = vmatprep.subr.bf16.mxu0 0
        %311 = vmatpush2.bf16.msra.mxu0 0
        %312 = vmatprep.mubr.bf16.mxu0 0
        %313 = vmatmul.mubr.bf16.gmra.mxu0 %v222
        %v314 = vpop.f32.mrf.mxu0
        %v315 = vadd.f32 0.0, %v314
        %v316 = vpop.f32.mrf.mxu0
        %v317 = vadd.f32 0.0, %v316
        %v318 = vpop.f32.mrf.mxu0
        %v319 = vadd.f32 0.0, %v318
        %v320 = vpop.f32.mrf.mxu0
        %v321 = vadd.f32 0.0, %v320
        %322 = vmatprep.mubr.bf16.mxu0 0
        %323 = vmatmul.mubr.bf16.gmra.mxu0 %v225
        %v324 = vpop.f32.mrf.mxu0
        %v325 = vadd.f32 0.0, %v324
        %v326 = vpop.f32.mrf.mxu0
        %v327 = vadd.f32 0.0, %v326
        %v328 = vpop.f32.mrf.mxu0
        %v329 = vadd.f32 0.0, %v328
        %v330 = vpop.f32.mrf.mxu0
        %v331 = vadd.f32 0.0, %v330
        %332 = vdwg.mxu0
        %vm333 = vcmp.ge.f32.partialorder %v262, 0.0
        %vm334 = vcmp.ge.f32.partialorder %v264, 0.0
        %vm335 = vcmp.ge.f32.partialorder %v315, 0.0
        %vm336 = vcmp.ge.f32.partialorder %v317, 0.0
        %vm337 = vcmp.ge.f32.partialorder %v266, 0.0
        %vm338 = vcmp.ge.f32.partialorder %v268, 0.0
        %vm339 = vcmp.ge.f32.partialorder %v319, 0.0
        %vm340 = vcmp.ge.f32.partialorder %v321, 0.0
        %vm341 = vcmp.ge.f32.partialorder %v272, 0.0
        %vm342 = vcmp.ge.f32.partialorder %v274, 0.0
        %vm343 = vcmp.ge.f32.partialorder %v325, 0.0
        %vm344 = vcmp.ge.f32.partialorder %v327, 0.0
        %vm345 = vcmp.ge.f32.partialorder %v276, 0.0
        %vm346 = vcmp.ge.f32.partialorder %v278, 0.0
        %vm347 = vcmp.ge.f32.partialorder %v329, 0.0
        %vm348 = vcmp.ge.f32.partialorder %v331, 0.0
        %v349 = vmul.f32 %v262, 0.01
        %v350 = vmul.f32 %v264, 0.01
        %v351 = vmul.f32 %v315, 0.01
        %v352 = vmul.f32 %v317, 0.01
        %v353 = vmul.f32 %v266, 0.01
        %v354 = vmul.f32 %v268, 0.01
        %v355 = vmul.f32 %v319, 0.01
        %v356 = vmul.f32 %v321, 0.01
        %v357 = vmul.f32 %v272, 0.01
        %v358 = vmul.f32 %v274, 0.01
        %v359 = vmul.f32 %v325, 0.01
        %v360 = vmul.f32 %v327, 0.01
        %v361 = vmul.f32 %v276, 0.01
        %v362 = vmul.f32 %v278, 0.01
        %v363 = vmul.f32 %v329, 0.01
        %v364 = vmul.f32 %v331, 0.01
        %v365 = vsel %vm333, %v262, %v349
        %v366 = vsel %vm334, %v264, %v350
        %v367 = vsel %vm335, %v315, %v351
        %v368 = vsel %vm336, %v317, %v352
        %v369 = vsel %vm337, %v266, %v353
        %v370 = vsel %vm338, %v268, %v354
        %v371 = vsel %vm339, %v319, %v355
        %v372 = vsel %vm340, %v321, %v356
        %v373 = vsel %vm341, %v272, %v357
        %v374 = vsel %vm342, %v274, %v358
        %v375 = vsel %vm343, %v325, %v359
        %v376 = vsel %vm344, %v327, %v360
        %v377 = vsel %vm345, %v276, %v361
        %v378 = vsel %vm346, %v278, %v362
        %v379 = vsel %vm347, %v329, %v363
        %v380 = vsel %vm348, %v331, %v364
        %v381 = vpack.c.bf16 %v369, %v365
        %v382 = vpack.c.bf16 %v370, %v366
        %v383 = vpack.c.bf16 %v371, %v367
        %v384 = vpack.c.bf16 %v372, %v368
        %v385 = vpack.c.bf16 %v377, %v373
        %v386 = vpack.c.bf16 %v378, %v374
        %v387 = vpack.c.bf16 %v379, %v375
        %v388 = vpack.c.bf16 %v380, %v376
        %v389 = vld [vmem:[#allocation2] sm:$0xf]
        %v390 = vld [vmem:[#allocation2 + $0x4] sm:$0xf]
        %v391 = vld [vmem:[#allocation2 + $0x8] sm:$0xf]
        %v392 = vld [vmem:[#allocation2 + $0xc] sm:$0xf]
        %v393 = vld [vmem:[#allocation2 + $0x10] sm:$0xf]
        %v394 = vld [vmem:[#allocation2 + $0x14] sm:$0xf]
        %v395 = vld [vmem:[#allocation2 + $0x18] sm:$0xf]
        %v396 = vld [vmem:[#allocation2 + $0x1c] sm:$0xf]
        %v397 = vld [vmem:[#allocation2 + $0x20] sm:$0xf]
        %v398 = vld [vmem:[#allocation2 + $0x24] sm:$0xf]
        %v399 = vld [vmem:[#allocation2 + $0x28] sm:$0xf]
        %v400 = vld [vmem:[#allocation2 + $0x2c] sm:$0xf]
        %v401 = vld [vmem:[#allocation2 + $0x30] sm:$0xf]
        %v402 = vld [vmem:[#allocation2 + $0x34] sm:$0xf]
        %v403 = vld [vmem:[#allocation2 + $0x38] sm:$0xf]
        %v404 = vld [vmem:[#allocation2 + $0x3c] sm:$0xf]
        %v405 = vld [vmem:[#allocation2 + $0x40] sm:$0xf]
        %v406 = vld [vmem:[#allocation2 + $0x44] sm:$0xf]
        %v407 = vld [vmem:[#allocation2 + $0x48] sm:$0xf]
        %v408 = vld [vmem:[#allocation2 + $0x4c] sm:$0xf]
        %v409 = vld [vmem:[#allocation2 + $0x50] sm:$0xf]
        %v410 = vld [vmem:[#allocation2 + $0x54] sm:$0xf]
        %v411 = vld [vmem:[#allocation2 + $0x58] sm:$0xf]
        %v412 = vld [vmem:[#allocation2 + $0x5c] sm:$0xf]
        %v413 = vld [vmem:[#allocation2 + $0x60] sm:$0xf]
        %v414 = vld [vmem:[#allocation2 + $0x64] sm:$0xf]
        %v415 = vld [vmem:[#allocation2 + $0x68] sm:$0xf]
        %v416 = vld [vmem:[#allocation2 + $0x6c] sm:$0xf]
        %v417 = vld [vmem:[#allocation2 + $0x70] sm:$0xf]
        %v418 = vld [vmem:[#allocation2 + $0x74] sm:$0xf]
        %v419 = vld [vmem:[#allocation2 + $0x78] sm:$0xf]
        %v420 = vld [vmem:[#allocation2 + $0x7c] sm:$0xf]
        %v421 = vld [vmem:[#allocation2 + $0x80] sm:$0xf]
        %v422 = vld [vmem:[#allocation2 + $0x84] sm:$0xf]
        %v423 = vld [vmem:[#allocation2 + $0x88] sm:$0xf]
        %v424 = vld [vmem:[#allocation2 + $0x8c] sm:$0xf]
        %v425 = vld [vmem:[#allocation2 + $0x90] sm:$0xf]
        %v426 = vld [vmem:[#allocation2 + $0x94] sm:$0xf]
        %v427 = vld [vmem:[#allocation2 + $0x98] sm:$0xf]
        %v428 = vld [vmem:[#allocation2 + $0x9c] sm:$0xf]
        %v429 = vld [vmem:[#allocation2 + $0xa0] sm:$0xf]
        %v430 = vld [vmem:[#allocation2 + $0xa4] sm:$0xf]
        %v431 = vld [vmem:[#allocation2 + $0xa8] sm:$0xf]
        %v432 = vld [vmem:[#allocation2 + $0xac] sm:$0xf]
        %v433 = vld [vmem:[#allocation2 + $0xb0] sm:$0xf]
        %v434 = vld [vmem:[#allocation2 + $0xb4] sm:$0xf]
        %v435 = vld [vmem:[#allocation2 + $0xb8] sm:$0xf]
        %v436 = vld [vmem:[#allocation2 + $0xbc] sm:$0xf]
        %v437 = vld [vmem:[#allocation2 + $0xc0] sm:$0xf]
        %v438 = vld [vmem:[#allocation2 + $0xc4] sm:$0xf]
        %v439 = vld [vmem:[#allocation2 + $0xc8] sm:$0xf]
        %v440 = vld [vmem:[#allocation2 + $0xcc] sm:$0xf]
        %v441 = vld [vmem:[#allocation2 + $0xd0] sm:$0xf]
        %v442 = vld [vmem:[#allocation2 + $0xd4] sm:$0xf]
        %v443 = vld [vmem:[#allocation2 + $0xd8] sm:$0xf]
        %v444 = vld [vmem:[#allocation2 + $0xdc] sm:$0xf]
        %v445 = vld [vmem:[#allocation2 + $0xe0] sm:$0xf]
        %v446 = vld [vmem:[#allocation2 + $0xe4] sm:$0xf]
        %v447 = vld [vmem:[#allocation2 + $0xe8] sm:$0xf]
        %v448 = vld [vmem:[#allocation2 + $0xec] sm:$0xf]
        %v449 = vld [vmem:[#allocation2 + $0xf0] sm:$0xf]
        %v450 = vld [vmem:[#allocation2 + $0xf4] sm:$0xf]
        %v451 = vld [vmem:[#allocation2 + $0xf8] sm:$0xf]
        %v452 = vld [vmem:[#allocation2 + $0xfc] sm:$0xf]
        %v517 = vunpack.c.l.b16 %v389
        %v518 = vunpack.c.l.b16 %v390
        %v519 = vunpack.c.l.b16 %v391
        %v520 = vunpack.c.l.b16 %v392
        %v521 = vunpack.c.l.b16 %v393
        %v522 = vunpack.c.l.b16 %v394
        %v523 = vunpack.c.l.b16 %v395
        %v524 = vunpack.c.l.b16 %v396
        %v525 = vunpack.c.l.b16 %v397
        %v526 = vunpack.c.l.b16 %v398
        %v527 = vunpack.c.l.b16 %v399
        %v528 = vunpack.c.l.b16 %v400
        %v529 = vunpack.c.l.b16 %v401
        %v530 = vunpack.c.l.b16 %v402
        %v531 = vunpack.c.l.b16 %v403
        %v532 = vunpack.c.l.b16 %v404
        %v533 = vunpack.c.l.b16 %v405
        %v534 = vunpack.c.l.b16 %v406
        %v535 = vunpack.c.l.b16 %v407
        %v536 = vunpack.c.l.b16 %v408
        %v537 = vunpack.c.l.b16 %v409
        %v538 = vunpack.c.l.b16 %v410
        %v539 = vunpack.c.l.b16 %v411
        %v540 = vunpack.c.l.b16 %v412
        %v541 = vunpack.c.l.b16 %v413
        %v542 = vunpack.c.l.b16 %v414
        %v543 = vunpack.c.l.b16 %v415
        %v544 = vunpack.c.l.b16 %v416
        %v545 = vunpack.c.l.b16 %v417
        %v546 = vunpack.c.l.b16 %v418
        %v547 = vunpack.c.l.b16 %v419
        %v548 = vunpack.c.l.b16 %v420
        %v549 = vunpack.c.l.b16 %v421
        %v550 = vunpack.c.l.b16 %v422
        %v551 = vunpack.c.l.b16 %v423
        %v552 = vunpack.c.l.b16 %v424
        %v553 = vunpack.c.l.b16 %v425
        %v554 = vunpack.c.l.b16 %v426
        %v555 = vunpack.c.l.b16 %v427
        %v556 = vunpack.c.l.b16 %v428
        %v557 = vunpack.c.l.b16 %v429
        %v558 = vunpack.c.l.b16 %v430
        %v559 = vunpack.c.l.b16 %v431
        %v560 = vunpack.c.l.b16 %v432
        %v561 = vunpack.c.l.b16 %v433
        %v562 = vunpack.c.l.b16 %v434
        %v563 = vunpack.c.l.b16 %v435
        %v564 = vunpack.c.l.b16 %v436
        %v565 = vunpack.c.l.b16 %v437
        %v566 = vunpack.c.l.b16 %v438
        %v567 = vunpack.c.l.b16 %v439
        %v568 = vunpack.c.l.b16 %v440
        %v569 = vunpack.c.l.b16 %v441
        %v570 = vunpack.c.l.b16 %v442
        %v571 = vunpack.c.l.b16 %v443
        %v572 = vunpack.c.l.b16 %v444
        %v573 = vunpack.c.l.b16 %v445
        %v574 = vunpack.c.l.b16 %v446
        %v575 = vunpack.c.l.b16 %v447
        %v576 = vunpack.c.l.b16 %v448
        %v577 = vunpack.c.l.b16 %v449
        %v578 = vunpack.c.l.b16 %v450
        %v579 = vunpack.c.l.b16 %v451
        %v580 = vunpack.c.l.b16 %v452
        %v581 = vpack.c.b16 %v518, %v517
        %v582 = vpack.c.b16 %v520, %v519
        %v583 = vpack.c.b16 %v522, %v521
        %v584 = vpack.c.b16 %v524, %v523
        %v585 = vpack.c.b16 %v526, %v525
        %v586 = vpack.c.b16 %v528, %v527
        %v587 = vpack.c.b16 %v530, %v529
        %v588 = vpack.c.b16 %v532, %v531
        %v589 = vpack.c.b16 %v534, %v533
        %v590 = vpack.c.b16 %v536, %v535
        %v591 = vpack.c.b16 %v538, %v537
        %v592 = vpack.c.b16 %v540, %v539
        %v593 = vpack.c.b16 %v542, %v541
        %v594 = vpack.c.b16 %v544, %v543
        %v595 = vpack.c.b16 %v546, %v545
        %v596 = vpack.c.b16 %v548, %v547
        %v597 = vpack.c.b16 %v550, %v549
        %v598 = vpack.c.b16 %v552, %v551
        %v599 = vpack.c.b16 %v554, %v553
        %v600 = vpack.c.b16 %v556, %v555
        %v601 = vpack.c.b16 %v558, %v557
        %v602 = vpack.c.b16 %v560, %v559
        %v603 = vpack.c.b16 %v562, %v561
        %v604 = vpack.c.b16 %v564, %v563
        %v605 = vpack.c.b16 %v566, %v565
        %v606 = vpack.c.b16 %v568, %v567
        %v607 = vpack.c.b16 %v570, %v569
        %v608 = vpack.c.b16 %v572, %v571
        %v609 = vpack.c.b16 %v574, %v573
        %v610 = vpack.c.b16 %v576, %v575
        %v611 = vpack.c.b16 %v578, %v577
        %v612 = vpack.c.b16 %v580, %v579
        %645 = vmatprep.subr.bf16.mxu0 0
        %646 = vmatpush1.bf16.msra.mxu0 %v588
        %647 = vmatprep.subr.bf16.mxu0 0
        %648 = vmatpush1.bf16.msra.mxu0 %v587
        %649 = vmatprep.subr.bf16.mxu0 0
        %650 = vmatpush1.bf16.msra.mxu0 %v586
        %651 = vmatprep.subr.bf16.mxu0 0
        %652 = vmatpush1.bf16.msra.mxu0 %v585
        %653 = vmatprep.subr.bf16.mxu0 0
        %654 = vmatpush1.bf16.msra.mxu0 %v584
        %655 = vmatprep.subr.bf16.mxu0 0
        %656 = vmatpush1.bf16.msra.mxu0 %v583
        %657 = vmatprep.subr.bf16.mxu0 0
        %658 = vmatpush1.bf16.msra.mxu0 %v582
        %659 = vmatprep.subr.bf16.mxu0 0
        %660 = vmatpush1.bf16.msra.mxu0 %v581
        %661 = vmatprep.subr.bf16.mxu0 0
        %662 = vmatpush2.bf16.msra.mxu0 %v596
        %663 = vmatprep.subr.bf16.mxu0 0
        %664 = vmatpush2.bf16.msra.mxu0 %v595
        %665 = vmatprep.subr.bf16.mxu0 0
        %666 = vmatpush2.bf16.msra.mxu0 %v594
        %667 = vmatprep.subr.bf16.mxu0 0
        %668 = vmatpush2.bf16.msra.mxu0 %v593
        %669 = vmatprep.subr.bf16.mxu0 0
        %670 = vmatpush2.bf16.msra.mxu0 %v592
        %671 = vmatprep.subr.bf16.mxu0 0
        %672 = vmatpush2.bf16.msra.mxu0 %v591
        %673 = vmatprep.subr.bf16.mxu0 0
        %674 = vmatpush2.bf16.msra.mxu0 %v590
        %675 = vmatprep.subr.bf16.mxu0 0
        %676 = vmatpush2.bf16.msra.mxu0 %v589
        %677 = vmatprep.mubr.bf16.mxu0 %v382
        %678 = vmatmul.mubr.bf16.gmra.mxu0 %v381
        %v679 = vpop.f32.mrf.mxu0
        %v680 = vadd.f32 0.0, %v679
        %v681 = vpop.f32.mrf.mxu0
        %v682 = vpop.f32.mrf.mxu0
        %v683 = vadd.f32 0.0, %v682
        %v684 = vpop.f32.mrf.mxu0
        %685 = vmatprep.mubr.bf16.mxu0 %v386
        %686 = vmatmul.mubr.bf16.gmra.mxu0 %v385
        %v687 = vpop.f32.mrf.mxu0
        %v688 = vadd.f32 0.0, %v687
        %v689 = vpop.f32.mrf.mxu0
        %v690 = vpop.f32.mrf.mxu0
        %v691 = vadd.f32 0.0, %v690
        %v692 = vpop.f32.mrf.mxu0
        %693 = vdwg.mxu0
        %694 = vmatprep.subr.bf16.mxu0 0
        %695 = vmatpush1.bf16.msra.mxu0 %v604
        %696 = vmatprep.subr.bf16.mxu0 0
        %697 = vmatpush1.bf16.msra.mxu0 %v603
        %698 = vmatprep.subr.bf16.mxu0 0
        %699 = vmatpush1.bf16.msra.mxu0 %v602
        %700 = vmatprep.subr.bf16.mxu0 0
        %701 = vmatpush1.bf16.msra.mxu0 %v601
        %702 = vmatprep.subr.bf16.mxu0 0
        %703 = vmatpush1.bf16.msra.mxu0 %v600
        %704 = vmatprep.subr.bf16.mxu0 0
        %705 = vmatpush1.bf16.msra.mxu0 %v599
        %706 = vmatprep.subr.bf16.mxu0 0
        %707 = vmatpush1.bf16.msra.mxu0 %v598
        %708 = vmatprep.subr.bf16.mxu0 0
        %709 = vmatpush1.bf16.msra.mxu0 %v597
        %710 = vmatprep.subr.bf16.mxu0 0
        %711 = vmatpush2.bf16.msra.mxu0 %v612
        %712 = vmatprep.subr.bf16.mxu0 0
        %713 = vmatpush2.bf16.msra.mxu0 %v611
        %714 = vmatprep.subr.bf16.mxu0 0
        %715 = vmatpush2.bf16.msra.mxu0 %v610
        %716 = vmatprep.subr.bf16.mxu0 0
        %717 = vmatpush2.bf16.msra.mxu0 %v609
        %718 = vmatprep.subr.bf16.mxu0 0
        %719 = vmatpush2.bf16.msra.mxu0 %v608
        %720 = vmatprep.subr.bf16.mxu0 0
        %721 = vmatpush2.bf16.msra.mxu0 %v607
        %722 = vmatprep.subr.bf16.mxu0 0
        %723 = vmatpush2.bf16.msra.mxu0 %v606
        %724 = vmatprep.subr.bf16.mxu0 0
        %725 = vmatpush2.bf16.msra.mxu0 %v605
        %726 = vmatprep.mubr.bf16.mxu0 %v384
        %727 = vmatmul.mubr.bf16.gmra.mxu0 %v383
        %v728 = vpop.f32.mrf.mxu0
        %v729 = vadd.f32 %v680, %v728
        %v730 = vpop.f32.mrf.mxu0
        %v731 = vpop.f32.mrf.mxu0
        %v732 = vadd.f32 %v683, %v731
        %v733 = vpop.f32.mrf.mxu0
        %734 = vmatprep.mubr.bf16.mxu0 %v388
        %735 = vmatmul.mubr.bf16.gmra.mxu0 %v387
        %v736 = vpop.f32.mrf.mxu0
        %v737 = vadd.f32 %v688, %v736
        %v738 = vpop.f32.mrf.mxu0
        %v739 = vpop.f32.mrf.mxu0
        %v740 = vadd.f32 %v691, %v739
        %v741 = vpop.f32.mrf.mxu0
        %742 = vdwg.mxu0
        %743 = vst [vmem:[%s187] sm:$0xff] %v729
        %744 = vst [vmem:[%s187 + $0x8] sm:$0xff] %v732
        %745 = vst [vmem:[%s187 + $0x10] sm:$0xff] %v737
        %746 = vst [vmem:[%s187 + $0x18] sm:$0xff] %v740
        %s747 = smul.u32 4, %s15
        %p748 = scmp.lt.s32.totalorder %s747, 7
        %s749 = scalar_select %p748, %s747, 7
        %s750 = smul.addr %s749, 8
        %s751 = scalar_lea.vmem %s3, %s750
        // Predicated region
        $region37: #{deep_svdd_mlp_forward.2} parent=31 // pred_check
          %p752 = pneg %p101
        $region38: #{deep_svdd_mlp_forward.2} parent=31 // pred_check_branch
          %754 = sbr.rel (%p752) target = $region40
        $region39: #{deep_svdd_mlp_forward.2} parent=31 // pred_region
          %s755 = smul.u32 4, %s15
        $region40: #{deep_svdd_mlp_forward.2} parent=31 // pred_fallthru
          _
      $region32: #{deep_svdd_mlp_forward.2} parent=5 // pred_fallthru
        _
      %p756 = scmp.le.s32.totalorder 2, %s10
      // Predicated region
      $region41: #{deep_svdd_mlp_forward.2} parent=5 // pred_check
        %p757 = pneg %p756
      $region42: #{deep_svdd_mlp_forward.2} parent=5 // pred_check_branch
        %759 = sbr.rel (%p757) target = $region44
      $region43: #{deep_svdd_mlp_forward.2} parent=5 // pred_region
        %s760 = ssub.s32 %s10, 2
        // Predicated region
        $region45: #{deep_svdd_mlp_forward.2} parent=43 // pred_check
          %p761 = pneg %p107
        $region46: #{deep_svdd_mlp_forward.2} parent=43 // pred_check_branch
          %763 = sbr.rel (%p761) target = $region48
        $region47: #{deep_svdd_mlp_forward.2} parent=43 // pred_region
          %s764 = smul.u32 4, %s16
          %p765 = scmp.lt.s32.totalorder %s764, 7
          %s766 = scalar_select %p765, %s764, 7
          %s767 = smul.addr %s766, 8
          %s768 = scalar_lea.vmem %s3, %s767
        $region48: #{deep_svdd_mlp_forward.2} parent=43 // pred_fallthru
          _
      $region44: #{deep_svdd_mlp_forward.2} parent=5 // pred_fallthru
        _
    $region6: #{deep_svdd_mlp_forward.2} parent=1 // loop_footer
      %s14 = sadd.s32 1, %s10
    $region7: #{deep_svdd_mlp_forward.2} parent=1 // loop_footer_branch
      %9 = sbr.rel target = $region3
    $region8: #{deep_svdd_mlp_forward.2} parent=1 // loop_exit
      _
    %769 = vsyncpa [#allocation3], 1
    %s770 = scalar_lea.sflag [#allocation3], 1
    %771 = vsyncpa %s770, 1

// kernel: deep_svdd_mlp_forward.3
$region0: #{deep_svdd_mlp_forward.3}
  #allocation0 [shape = 'u32[]', space=smem, size = 0x4, offset = 0x4, fixed_abs, tag = 'smem constant byte address 0x4 - core index']
  #allocation1 [shape = 'u32[144,128]{1,0:T(1,128)}', space=vmem, size = 0x12000, scoped, tag = 'internal scratch']
  %s0 = inlined_call_operand.vmem [shape: f32[64,128], index: 0, kind: input, shape index: {}]
  %s1 = inlined_call_operand.vmem [shape: bf16[128,128], index: 1, kind: input, shape index: {}]
  %s2 = inlined_call_operand.vmem [shape: f32[64,128], index: 2, kind: output, shape index: {}]
  %s3 = sld [smem:[#allocation0]]
  $region41: #{deep_svdd_mlp_forward.3} parent=0
    _
  %s5 = ssub.s32 1, %s3
  %s6 = scalar_select 0, %s5, %s3
  loop: start=0, step=1, limit=4
  $region2: #{deep_svdd_mlp_forward.3} parent=0 // loop_pre_header
    _
  $region3: #{deep_svdd_mlp_forward.3} parent=0 // loop_header
    %s8 = sphi 0, %s12
    %p9 = scmp.ge.s32.totalorder %s8, 4
    %s18 = sphi 0, %s20
    %s21 = sphi 0, %s18
    %s22 = sphi 0, %s21
    %s38 = sphi 0, %s22
    %s42 = sphi 0, %s42
    %s44 = sphi 0, %s42
    %s45 = sphi 0, %s44
    %s59 = sphi 0, %s45
    %s65 = sphi 0, %s67
    %s68 = sphi 0, %s65
    %s69 = sphi 0, %s68
    %s85 = sphi 0, %s69
  $region4: #{deep_svdd_mlp_forward.3} parent=0 // loop_header_branch
    %11 = sbr.rel (%p9) target = $region8
  $region5: #{deep_svdd_mlp_forward.3} parent=0 // loop_body
    %s13 = ssub.s32 %s8, 1
    %s14 = ssub.s32 %s8, 2
    %s15 = sadd.s32 %s8, 1
    %s16 = ssub.s32 %s8, %s15
    %p17 = scmp.eq.s32.totalorder %s16, 0
    %s19 = sadd.s32 %s18, 1
    %s20 = scalar_select %p17, %s18, %s19
    %p23 = pneg %p17
    %p24 = scmp.eq.s32.totalorder %s8, 1
    %p25 = por %p23, %p24
    %p26 = scmp.ne.s32.totalorder %s18, %s21
    %p27 = scmp.eq.s32.totalorder %s8, 0
    %p28 = por %p26, %p27
    %p29 = scmp.ne.s32.totalorder %s18, %s21
    %p30 = scmp.eq.s32.totalorder %s13, 1
    %p31 = por %p29, %p30
    %p32 = scmp.ne.s32.totalorder %s21, %s22
    %p33 = scmp.eq.s32.totalorder %s13, 0
    %p34 = por %p32, %p33
    %p35 = scmp.ne.s32.totalorder %s21, %s22
    %p36 = scmp.eq.s32.totalorder %s14, 1
    %p37 = por %p35, %p36
    %p39 = scmp.ne.s32.totalorder %s22, %s38
    %p40 = scmp.eq.s32.totalorder %s14, 0
    %p41 = por %p39, %p40
    %s43 = sadd.s32 %s42, 1
    %p46 = scmp.eq.s32.totalorder %s8, 1
    %p47 = scmp.ne.s32.totalorder %s42, %s44
    %p48 = scmp.eq.s32.totalorder %s8, 0
    %p49 = por %p47, %p48
    %p50 = scmp.ne.s32.totalorder %s42, %s44
    %p51 = scmp.eq.s32.totalorder %s13, 1
    %p52 = por %p50, %p51
    %p53 = scmp.ne.s32.totalorder %s44, %s45
    %p54 = scmp.eq.s32.totalorder %s13, 0
    %p55 = por %p53, %p54
    %p56 = scmp.ne.s32.totalorder %s44, %s45
    %p57 = scmp.eq.s32.totalorder %s14, 1
    %p58 = por %p56, %p57
    %p60 = scmp.ne.s32.totalorder %s45, %s59
    %p61 = scmp.eq.s32.totalorder %s14, 0
    %p62 = por %p60, %p61
    %s63 = ssub.s32 %s8, %s15
    %p64 = scmp.eq.s32.totalorder %s63, 0
    %s66 = sadd.s32 %s65, 1
    %s67 = scalar_select %p64, %s65, %s66
    %p70 = pneg %p64
    %p71 = scmp.eq.s32.totalorder %s8, 1
    %p72 = por %p70, %p71
    %p73 = scmp.ne.s32.totalorder %s65, %s68
    %p74 = scmp.eq.s32.totalorder %s8, 0
    %p75 = por %p73, %p74
    %p76 = scmp.ne.s32.totalorder %s65, %s68
    %p77 = scmp.eq.s32.totalorder %s13, 1
    %p78 = por %p76, %p77
    %p79 = scmp.ne.s32.totalorder %s68, %s69
    %p80 = scmp.eq.s32.totalorder %s13, 0
    %p81 = por %p79, %p80
    %p82 = scmp.ne.s32.totalorder %s68, %s69
    %p83 = scmp.eq.s32.totalorder %s14, 1
    %p84 = por %p82, %p83
    %p86 = scmp.ne.s32.totalorder %s69, %s85
    %p87 = scmp.eq.s32.totalorder %s14, 0
    %p88 = por %p86, %p87
    %p89 = scmp.le.s32.totalorder 1, %s8
    %p90 = scmp.lt.s32.totalorder %s8, 3
    %p91 = pnand %p89, %p90
    %p92 = pneg %p91
    // Predicated region
    $region9: #{deep_svdd_mlp_forward.3} parent=5 // pred_check
      _
    $region10: #{deep_svdd_mlp_forward.3} parent=5 // pred_check_branch
      %94 = sbr.rel (%p91) target = $region12
    $region11: #{deep_svdd_mlp_forward.3} parent=5 // pred_region
      %s95 = ssub.s32 %s8, 1
      // Predicated region
      $region13: #{deep_svdd_mlp_forward.3} parent=11 // pred_check
        %p96 = pneg %p55
      $region14: #{deep_svdd_mlp_forward.3} parent=11 // pred_check_branch
        %98 = sbr.rel (%p96) target = $region16
      $region15: #{deep_svdd_mlp_forward.3} parent=11 // pred_region
        _
      $region16: #{deep_svdd_mlp_forward.3} parent=11 // pred_fallthru
        _
    $region12: #{deep_svdd_mlp_forward.3} parent=5 // pred_fallthru
      _
    %p99 = scmp.lt.s32.totalorder %s8, 2
    // Predicated region
    $region17: #{deep_svdd_mlp_forward.3} parent=5 // pred_check
      %p100 = pneg %p99
    $region18: #{deep_svdd_mlp_forward.3} parent=5 // pred_check_branch
      %102 = sbr.rel (%p100) target = $region20
    $region19: #{deep_svdd_mlp_forward.3} parent=5 // pred_region
      // Predicated region
      $region21: #{deep_svdd_mlp_forward.3} parent=19 // pred_check
        %p103 = pneg %p28
      $region22: #{deep_svdd_mlp_forward.3} parent=19 // pred_check_branch
        %105 = sbr.rel (%p103) target = $region24
      $region23: #{deep_svdd_mlp_forward.3} parent=19 // pred_region
        %s106 = smul.u32 4, %s8
        %p107 = scmp.lt.s32.totalorder %s106, 7
        %s108 = scalar_select %p107, %s106, 7
        %s109 = smul.addr %s108, 8
        %s110 = scalar_lea.vmem %s0, %s109
        %s111 = smul.u32 4, %s8
      $region24: #{deep_svdd_mlp_forward.3} parent=19 // pred_fallthru
        _
    $region20: #{deep_svdd_mlp_forward.3} parent=5 // pred_fallthru
      _
    %p112 = scmp.le.s32.totalorder 1, %s8
    %p113 = scmp.lt.s32.totalorder %s8, 3
    %p114 = pnand %p112, %p113
    %p115 = pneg %p114
    // Predicated region
    $region25: #{deep_svdd_mlp_forward.3} parent=5 // pred_check
      _
    $region26: #{deep_svdd_mlp_forward.3} parent=5 // pred_check_branch
      %117 = sbr.rel (%p114) target = $region28
    $region27: #{deep_svdd_mlp_forward.3} parent=5 // pred_region
      %s118 = ssub.s32 %s8, 1
      %s119 = smul.u32 4, %s13
      %p120 = scmp.lt.s32.totalorder %s119, 7
      %s121 = scalar_select %p120, %s119, 7
      %s122 = smul.addr %s121, 8
      %s123 = scalar_lea.vmem %s0, %s122
      %p124 = pneg %p34
      %p125 = pneg %p31
      %p126 = pneg %p55
      %p127 = pneg %p52
      %p128 = pneg %p81
      %p129 = pneg %p78
      %s130 = smul.u32 4, %s13
      %p131 = scmp.lt.s32.totalorder %s130, 7
      %s132 = scalar_select %p131, %s130, 7
      %s133 = smul.addr %s132, 8
      %s134 = scalar_lea.vmem %s2, %s133
      %s135 = smul.u32 4, %s13
      %p136 = scmp.lt.s32.totalorder %s135, 7
      %s137 = scalar_select %p136, %s135, 7
      %s138 = smul.addr %s137, 8
      %s139 = scalar_lea.vmem %s0, %s138
      %s140 = smul.u32 4, %s13
      %s141 = smul.u32 4, %s13
      %p142 = scmp.lt.s32.totalorder %s141, 7
      %s143 = scalar_select %p142, %s141, 7
      %s144 = smul.addr %s143, 8
      %s145 = scalar_lea.vmem %s2, %s144
      %s146 = smul.u32 4, %s13
      %v148 = vld [vmem:[%s139] sm:$0xff]
      %v149 = vld [vmem:[%s139 + $0x8] sm:$0xff]
      %v150 = vld [vmem:[%s139 + $0x10] sm:$0xff]
      %v151 = vld [vmem:[%s139 + $0x18] sm:$0xff]
      %v152 = vpack.c.bf16 %v149, %v148
      %v153 = vpack.c.bf16 %v151, %v150
      %v154 = vld [vmem:[%s1] sm:$0xf]
      %v155 = vld [vmem:[%s1 + $0x4] sm:$0xf]
      %v156 = vld [vmem:[%s1 + $0x8] sm:$0xf]
      %v157 = vld [vmem:[%s1 + $0xc] sm:$0xf]
      %v158 = vld [vmem:[%s1 + $0x10] sm:$0xf]
      %v159 = vld [vmem:[%s1 + $0x14] sm:$0xf]
      %v160 = vld [vmem:[%s1 + $0x18] sm:$0xf]
      %v161 = vld [vmem:[%s1 + $0x1c] sm:$0xf]
      %v162 = vld [vmem:[%s1 + $0x20] sm:$0xf]
      %v163 = vld [vmem:[%s1 + $0x24] sm:$0xf]
      %v164 = vld [vmem:[%s1 + $0x28] sm:$0xf]
      %v165 = vld [vmem:[%s1 + $0x2c] sm:$0xf]
      %v166 = vld [vmem:[%s1 + $0x30] sm:$0xf]
      %v167 = vld [vmem:[%s1 + $0x34] sm:$0xf]
      %v168 = vld [vmem:[%s1 + $0x38] sm:$0xf]
      %v169 = vld [vmem:[%s1 + $0x3c] sm:$0xf]
      %v186 = vunpack.c.l.b16 %v154
      %v187 = vunpack.c.l.b16 %v155
      %v188 = vunpack.c.l.b16 %v156
      %v189 = vunpack.c.l.b16 %v157
      %v190 = vunpack.c.l.b16 %v158
      %v191 = vunpack.c.l.b16 %v159
      %v192 = vunpack.c.l.b16 %v160
      %v193 = vunpack.c.l.b16 %v161
      %v194 = vunpack.c.l.b16 %v162
      %v195 = vunpack.c.l.b16 %v163
      %v196 = vunpack.c.l.b16 %v164
      %v197 = vunpack.c.l.b16 %v165
      %v198 = vunpack.c.l.b16 %v166
      %v199 = vunpack.c.l.b16 %v167
      %v200 = vunpack.c.l.b16 %v168
      %v201 = vunpack.c.l.b16 %v169
      %v202 = vpack.c.b16 %v187, %v186
      %v203 = vpack.c.b16 %v189, %v188
      %v204 = vpack.c.b16 %v191, %v190
      %v205 = vpack.c.b16 %v193, %v192
      %v206 = vpack.c.b16 %v195, %v194
      %v207 = vpack.c.b16 %v197, %v196
      %v208 = vpack.c.b16 %v199, %v198
      %v209 = vpack.c.b16 %v201, %v200
      %218 = vmatprep.subr.bf16.mxu0 0
      %219 = vmatpush1.bf16.msra.mxu0 %v209
      %220 = vmatprep.subr.bf16.mxu0 0
      %221 = vmatpush1.bf16.msra.mxu0 %v208
      %222 = vmatprep.subr.bf16.mxu0 0
      %223 = vmatpush1.bf16.msra.mxu0 %v207
      %224 = vmatprep.subr.bf16.mxu0 0
      %225 = vmatpush1.bf16.msra.mxu0 %v206
      %226 = vmatprep.subr.bf16.mxu0 0
      %227 = vmatpush1.bf16.msra.mxu0 %v205
      %228 = vmatprep.subr.bf16.mxu0 0
      %229 = vmatpush1.bf16.msra.mxu0 %v204
      %230 = vmatprep.subr.bf16.mxu0 0
      %231 = vmatpush1.bf16.msra.mxu0 %v203
      %232 = vmatprep.subr.bf16.mxu0 0
      %233 = vmatpush1.bf16.msra.mxu0 %v202
      %234 = vmatprep.subr.bf16.mxu0 0
      %235 = vmatpush2.bf16.msra.mxu0 0
      %236 = vmatprep.subr.bf16.mxu0 0
      %237 = vmatpush2.bf16.msra.mxu0 0
      %238 = vmatprep.subr.bf16.mxu0 0
      %239 = vmatpush2.bf16.msra.mxu0 0
      %240 = vmatprep.subr.bf16.mxu0 0
      %241 = vmatpush2.bf16.msra.mxu0 0
      %242 = vmatprep.subr.bf16.mxu0 0
      %243 = vmatpush2.bf16.msra.mxu0 0
      %244 = vmatprep.subr.bf16.mxu0 0
      %245 = vmatpush2.bf16.msra.mxu0 0
      %246 = vmatprep.subr.bf16.mxu0 0
      %247 = vmatpush2.bf16.msra.mxu0 0
      %248 = vmatprep.subr.bf16.mxu0 0
      %249 = vmatpush2.bf16.msra.mxu0 0
      %250 = vmatprep.mubr.bf16.mxu0 0
      %251 = vmatmul.mubr.bf16.gmra.mxu0 %v152
      %v252 = vpop.f32.mrf.mxu0
      %v253 = vadd.f32 0.0, %v252
      %v254 = vpop.f32.mrf.mxu0
      %v255 = vpop.f32.mrf.mxu0
      %v256 = vadd.f32 0.0, %v255
      %v257 = vpop.f32.mrf.mxu0
      %258 = vmatprep.mubr.bf16.mxu0 0
      %259 = vmatmul.mubr.bf16.gmra.mxu0 %v153
      %v260 = vpop.f32.mrf.mxu0
      %v261 = vadd.f32 0.0, %v260
      %v262 = vpop.f32.mrf.mxu0
      %v263 = vpop.f32.mrf.mxu0
      %v264 = vadd.f32 0.0, %v263
      %v265 = vpop.f32.mrf.mxu0
      %266 = vdwg.mxu0
      %267 = vst [vmem:[%s145] sm:$0xff] %v253
      %268 = vst [vmem:[%s145 + $0x8] sm:$0xff] %v256
      %269 = vst [vmem:[%s145 + $0x10] sm:$0xff] %v261
      %270 = vst [vmem:[%s145 + $0x18] sm:$0xff] %v264
      %s271 = smul.u32 4, %s13
      %p272 = scmp.lt.s32.totalorder %s271, 7
      %s273 = scalar_select %p272, %s271, 7
      %s274 = smul.addr %s273, 8
      %s275 = scalar_lea.vmem %s2, %s274
      // Predicated region
      $region29: #{deep_svdd_mlp_forward.3} parent=27 // pred_check
        %p276 = pneg %p78
      $region30: #{deep_svdd_mlp_forward.3} parent=27 // pred_check_branch
        %278 = sbr.rel (%p276) target = $region32
      $region31: #{deep_svdd_mlp_forward.3} parent=27 // pred_region
        %s279 = smul.u32 4, %s13
      $region32: #{deep_svdd_mlp_forward.3} parent=27 // pred_fallthru
        _
    $region28: #{deep_svdd_mlp_forward.3} parent=5 // pred_fallthru
      _
    %p280 = scmp.le.s32.totalorder 2, %s8
    // Predicated region
    $region33: #{deep_svdd_mlp_forward.3} parent=5 // pred_check
      %p281 = pneg %p280
    $region34: #{deep_svdd_mlp_forward.3} parent=5 // pred_check_branch
      %283 = sbr.rel (%p281) target = $region36
    $region35: #{deep_svdd_mlp_forward.3} parent=5 // pred_region
      %s284 = ssub.s32 %s8, 2
      // Predicated region
      $region37: #{deep_svdd_mlp_forward.3} parent=35 // pred_check
        %p285 = pneg %p84
      $region38: #{deep_svdd_mlp_forward.3} parent=35 // pred_check_branch
        %287 = sbr.rel (%p285) target = $region40
      $region39: #{deep_svdd_mlp_forward.3} parent=35 // pred_region
        %s288 = smul.u32 4, %s14
        %p289 = scmp.lt.s32.totalorder %s288, 7
        %s290 = scalar_select %p289, %s288, 7
        %s291 = smul.addr %s290, 8
        %s292 = scalar_lea.vmem %s2, %s291
      $region40: #{deep_svdd_mlp_forward.3} parent=35 // pred_fallthru
        _
    $region36: #{deep_svdd_mlp_forward.3} parent=5 // pred_fallthru
      _
  $region6: #{deep_svdd_mlp_forward.3} parent=0 // loop_footer
    %s12 = sadd.s32 1, %s8
  $region7: #{deep_svdd_mlp_forward.3} parent=0 // loop_footer_branch
    %7 = sbr.rel target = $region3
  $region8: #{deep_svdd_mlp_forward.3} parent=0 // loop_exit
    _

</llo_original>
